<compile_context>
chip_gen: v5e
topology: v5e:2x2
jax: 0.10.0
libtpu: 0.0.40
codegen_flags: <defaults>
</compile_context>

<pallas_src>
import jax
import jax.numpy as jnp
from jax.experimental import pallas as pl
from jax.experimental.pallas import tpu as pltpu


# ----------------------------------------------------------------------------
# Kernel factory (closes over the static tile sizes).
# ----------------------------------------------------------------------------
def _make_kernel(B, L, C):
    R = B * L   # rows of the activation slab, l-major: row = l*B + b

    def kernel(x_ref, w1_ref, b1_ref, w2_ref, b2_ref, w3_ref, b3_ref,
               w4_ref, b4_ref, wl_ref, bl_ref, o_ref):
        # ---- layer 1: C_in = 1 -> rank-1 taps on the VPU (f32) --------------
        x = x_ref[0].astype(jnp.float32)                         # [R, 1]
        z1 = jnp.zeros((B, 1), jnp.float32)
        # Shifting by B rows moves l -> l-1 / l+1 for the SAME sample; the
        # zero block is both the 'same' padding and the sample-boundary mask.
        x_prev = jnp.concatenate([z1, x[:R - B, :]], axis=0)     # value at l-1
        x_next = jnp.concatenate([x[B:, :], z1], axis=0)         # value at l+1
        y = (x_prev * w1_ref[0] + x * w1_ref[1] + x_next * w1_ref[2]
             + b1_ref[...])
        a = jnp.maximum(y, 0.0).astype(jnp.bfloat16)             # [R, C]

        # ---- layers 2..4: fused-tap conv -> one K=3*C matmul per layer ------
        def conv3(a_bf, w_ref, b_ref):
            zc = jnp.zeros((B, C), a_bf.dtype)
            a_prev = jnp.concatenate([zc, a_bf[:R - B, :]], axis=0)
            a_next = jnp.concatenate([a_bf[B:, :], zc], axis=0)
            taps = jnp.concatenate([a_prev, a_bf, a_next], axis=1)   # [R, 3C]
            yy = jnp.dot(taps, w_ref[...],
                         preferred_element_type=jnp.float32)         # [R, C]
            yy = jnp.maximum(yy + b_ref[...], 0.0)
            return yy.astype(jnp.bfloat16)

        a = conv3(a, w2_ref, b2_ref)
        a = conv3(a, w3_ref, b3_ref)
        a = conv3(a, w4_ref, b4_ref)

        # ---- flatten + Linear as ONE matmul ---------------------------------
        # Lane-concat of the per-l [B, C] row blocks gives the per-sample
        # flattened activation [B, L*C] (column index l*C + c, matching the
        # pre-permuted wl).
        a_flat = jnp.concatenate(
            [a[l * B:(l + 1) * B, :] for l in range(L)], axis=1)      # [B, L*C]
        out = jnp.dot(a_flat, wl_ref[...],
                      preferred_element_type=jnp.float32) + bl_ref[...]
        o_ref[0] = out.astype(o_ref.dtype)

    return kernel


# ----------------------------------------------------------------------------
# Wrapper: pick per-step batch, build the l-major input slab, launch.
# ----------------------------------------------------------------------------
def _pick_block_batch(n, seq_len, target_rows=256, min_steps=2):
    """Largest divisor B of n with B*seq_len <= target_rows (MXU-filling slab)
    while keeping >= min_steps grid steps for megacore sharding on v7x."""
    max_b = max(1, target_rows // max(1, seq_len))
    if n >= min_steps:
        max_b = min(max_b, n // min_steps)
    max_b = max(1, min(max_b, n))
    best = 1
    for b in range(1, max_b + 1):
        if n % b == 0:
            best = b
    return best


def simple_cnn_forward(x, prep, block_batch=None):
    """x: [N, 1, L] (NCL, C=1) float32.  Returns [N, 1, datanum] float32."""
    N, c_in, L = x.shape
    assert c_in == 1
    C = 64
    D = prep["bl"].shape[1]
    B = block_batch if block_batch is not None else _pick_block_batch(N, L)
    assert N % B == 0, (N, B)
    G = N // B
    R = B * L

    # l-major slab per grid step: slab[g, l*B + b, 0] = x[g*B + b, 0, l].
    x_slab = jnp.transpose(x.reshape(G, B, L), (0, 2, 1)).reshape(G, R, 1)

    const2 = lambda g: (0, 0)
    const3 = lambda g: (0, 0, 0)

    flops = N * (L * 3 * 1 * C * 2            # layer 1 (C_in = 1)
                 + 3 * (L * 3 * C * C * 2)    # layers 2..4 (fused K = 3C)
                 + L * C * D * 2)             # flatten + Linear
    weight_bytes = sum(int(v.size) * v.dtype.itemsize for v in prep.values())
    bytes_accessed = int(x_slab.size) * 4 + N * D * 4 + weight_bytes

    out3 = pl.pallas_call(
        _make_kernel(B, L, C),
        out_shape=jax.ShapeDtypeStruct((G, B, D), jnp.float32),
        grid_spec=pltpu.PrefetchScalarGridSpec(
            num_scalar_prefetch=0,
            grid=(G,),
            in_specs=[
                pl.BlockSpec((1, R, 1), lambda g: (g, 0, 0)),   # input slab
                pl.BlockSpec(prep["w1"].shape, const3),          # [3,1,64] f32
                pl.BlockSpec(prep["b1"].shape, const2),
                pl.BlockSpec(prep["w2"].shape, const2),          # [192,64] bf16
                pl.BlockSpec(prep["b2"].shape, const2),
                pl.BlockSpec(prep["w3"].shape, const2),
                pl.BlockSpec(prep["b3"].shape, const2),
                pl.BlockSpec(prep["w4"].shape, const2),
                pl.BlockSpec(prep["b4"].shape, const2),
                pl.BlockSpec(prep["wl"].shape, const2),          # [L*64,D] bf16
                pl.BlockSpec(prep["bl"].shape, const2),
            ],
            out_specs=pl.BlockSpec((1, B, D), lambda g: (g, 0, 0)),
        ),
        compiler_params=pltpu.CompilerParams(
            dimension_semantics=("parallel",)),
        cost_estimate=pl.CostEstimate(
            flops=flops, transcendentals=0, bytes_accessed=bytes_accessed),
    )(x_slab, prep["w1"], prep["b1"], prep["w2"], prep["b2"],
      prep["w3"], prep["b3"], prep["w4"], prep["b4"],
      prep["wl"], prep["bl"])

    return out3.reshape(N, 1, D)


# ----------------------------------------------------------------------------
# Parameter init (PyTorch-like) and wrapper-side preprocessing.
# ----------------------------------------------------------------------------
def _uniform(key, shape, bound):
    return jax.random.uniform(key, shape, jnp.float32, -bound, bound)


def init_simple_cnn_params(key, datanum):
    keys = jax.random.split(key, 10)

    def conv_init(kw, kb, c_in, c_out, ksz):
        bound = 1.0 / (c_in * ksz) ** 0.5
        return (_uniform(kw, (c_out, c_in, ksz), bound),
                _uniform(kb, (c_out,), bound))

    def bn_init(c):
        return dict(gamma=jnp.ones((c,), jnp.float32),
                    beta=jnp.zeros((c,), jnp.float32),
                    mean=jnp.zeros((c,), jnp.float32),
                    var=jnp.ones((c,), jnp.float32))

    p = {
        "conv1": conv_init(keys[0], keys[1], 1, 64, 3),
        "conv2": conv_init(keys[2], keys[3], 64, 64, 3),
        "conv3": conv_init(keys[4], keys[5], 64, 64, 3),
        "conv4": conv_init(keys[6], keys[7], 64, 64, 3),
        "bn1": bn_init(64), "bn2": bn_init(64),
        "bn3": bn_init(64), "bn4": bn_init(64),
    }
    fan_in = datanum * 64
    bound = 1.0 / fan_in ** 0.5
    p["lin"] = (_uniform(keys[8], (datanum, fan_in), bound),
                _uniform(keys[9], (datanum,), bound))
    return p


def prepare_params(p, eps=1e-5):
    """Fold eval-mode BatchNorm into conv weight/bias, build fused-tap
    [3*C_in, C_out] conv weights, and pre-flatten the Linear weight to
    [L*C, D] in the kernel's l-major flatten order."""
    def fold(conv, bn):
        w, b = conv                                        # [C_out, C_in, 3]
        scale = bn["gamma"] / jnp.sqrt(bn["var"] + eps)
        w_eff = w * scale[:, None, None]
        b_eff = (b - bn["mean"]) * scale + bn["beta"]
        w_taps = jnp.transpose(w_eff, (2, 1, 0))           # [3, C_in, C_out]
        return w_taps, b_eff.reshape(1, -1).astype(jnp.float32)

    prep = {}
    w1_taps, prep["b1"] = fold(p["conv1"], p["bn1"])
    prep["w1"] = w1_taps.astype(jnp.float32)               # [3, 1, 64] VPU path
    for i in (2, 3, 4):
        wt, bb = fold(p[f"conv{i}"], p[f"bn{i}"])
        k, c_in, c_out = wt.shape
        prep[f"w{i}"] = wt.reshape(k * c_in, c_out).astype(jnp.bfloat16)
        prep[f"b{i}"] = bb

    w_lin, b_lin = p["lin"]                                # [D, 64*L], [D]
    D = w_lin.shape[0]
    C = 64
    L = w_lin.shape[1] // C
    # PyTorch flatten index = c*L + l; kernel flatten index = l*C + c.
    wl = jnp.transpose(w_lin.reshape(D, C, L), (2, 1, 0)).reshape(L * C, D)
    prep["wl"] = wl.astype(jnp.bfloat16)
    prep["bl"] = b_lin.reshape(1, D).astype(jnp.float32)
    return prep


# ----------------------------------------------------------------------------
# Pure-JAX reference (f32, highest precision) for correctness verification.
# ----------------------------------------------------------------------------
def simple_cnn_reference(x, params, eps=1e-5):
    a = x
    for i in (1, 2, 3, 4):
        w, b = params[f"conv{i}"]
        bn = params[f"bn{i}"]
        a = jax.lax.conv_general_dilated(
            a, w, window_strides=(1,), padding="SAME",
            dimension_numbers=("NCH", "OIH", "NCH"),
            precision=jax.lax.Precision.HIGHEST)
        a = a + b[None, :, None]
        scale = bn["gamma"] / jnp.sqrt(bn["var"] + eps)
        a = (a - bn["mean"][None, :, None]) * scale[None, :, None] \
            + bn["beta"][None, :, None]
        a = jnp.maximum(a, 0.0)
    w_lin, b_lin = params["lin"]
    flat = a.reshape(a.shape[0], -1)                       # channel-major flatten
    out = jnp.dot(flat, w_lin.T, precision=jax.lax.Precision.HIGHEST) + b_lin
    return out[:, None, :]


if __name__ == "__main__":
    key = jax.random.PRNGKey(0)
    datanum = 16     # sequence length; Linear is (datanum*64 -> datanum)
    N = 64           # small, but enough to exercise B=16 per step, grid=(4,)

    params = init_simple_cnn_params(key, datanum)
    prep = prepare_params(params)

    kx = jax.random.fold_in(key, 123)
    x = jax.random.normal(kx, (N, 1, datanum), jnp.float32)

    @jax.jit
    def fwd(x, prep):
        return simple_cnn_forward(x, prep)

    out = jax.block_until_ready(fwd(x, prep))

    assert out.shape == (N, 1, datanum), out.shape
    assert out.dtype == jnp.float32
    assert bool(jnp.all(jnp.isfinite(out)))

    ref = simple_cnn_reference(x, params)
    max_abs_err = float(jnp.max(jnp.abs(out - ref)))
    assert max_abs_err < 5e-2, f"max abs err vs reference: {max_abs_err}"

    print("KERNEL_OK")
</pallas_src>

<mosaic_0001>
module attributes {stable_mosaic.version = 11 : i64} {
  func.func @kernel(%arg0: i32, %arg1: memref<1x256x1xf32, #tpu.memory_space<vmem>>, %arg2: memref<3x1x64xf32, #tpu.memory_space<vmem>>, %arg3: memref<1x64xf32, #tpu.memory_space<vmem>>, %arg4: memref<192x64xbf16, #tpu.memory_space<vmem>>, %arg5: memref<1x64xf32, #tpu.memory_space<vmem>>, %arg6: memref<192x64xbf16, #tpu.memory_space<vmem>>, %arg7: memref<1x64xf32, #tpu.memory_space<vmem>>, %arg8: memref<192x64xbf16, #tpu.memory_space<vmem>>, %arg9: memref<1x64xf32, #tpu.memory_space<vmem>>, %arg10: memref<1024x16xbf16, #tpu.memory_space<vmem>>, %arg11: memref<1x16xf32, #tpu.memory_space<vmem>>, %arg12: memref<1x16x16xf32, #tpu.memory_space<vmem>>) attributes {dimension_semantics = [#tpu.dimension_semantics<parallel>], iteration_bounds = array<i64: 4>, scalar_prefetch = 0 : i64, scratch_operands = 0 : i64, tpu.core_type = #tpu.core_type<tc>, window_params = [{transform_indices = @transform_0, window_bounds = array<i64: 1, 256, 1>}, {pipeline_mode = #tpu.pipeline_mode<synchronous>, transform_indices = @transform_1, window_bounds = array<i64: 3, 1, 64>}, {pipeline_mode = #tpu.pipeline_mode<synchronous>, transform_indices = @transform_2, window_bounds = array<i64: 1, 64>}, {pipeline_mode = #tpu.pipeline_mode<synchronous>, transform_indices = @transform_3, window_bounds = array<i64: 192, 64>}, {pipeline_mode = #tpu.pipeline_mode<synchronous>, transform_indices = @transform_4, window_bounds = array<i64: 1, 64>}, {pipeline_mode = #tpu.pipeline_mode<synchronous>, transform_indices = @transform_5, window_bounds = array<i64: 192, 64>}, {pipeline_mode = #tpu.pipeline_mode<synchronous>, transform_indices = @transform_6, window_bounds = array<i64: 1, 64>}, {pipeline_mode = #tpu.pipeline_mode<synchronous>, transform_indices = @transform_7, window_bounds = array<i64: 192, 64>}, {pipeline_mode = #tpu.pipeline_mode<synchronous>, transform_indices = @transform_8, window_bounds = array<i64: 1, 64>}, {pipeline_mode = #tpu.pipeline_mode<synchronous>, transform_indices = @transform_9, window_bounds = array<i64: 1024, 16>}, {pipeline_mode = #tpu.pipeline_mode<synchronous>, transform_indices = @transform_10, window_bounds = array<i64: 1, 16>}, {transform_indices = @transform_11, window_bounds = array<i64: 1, 16, 16>}]} {
    %c0 = arith.constant 0 : index
    %c0_0 = arith.constant 0 : index
    %c0_1 = arith.constant 0 : index
    %0 = vector.load %arg1[%c0, %c0_0, %c0_1] : memref<1x256x1xf32, #tpu.memory_space<vmem>>, vector<1x256x1xf32>
    %1 = vector.shape_cast %0 : vector<1x256x1xf32> to vector<256x1xf32>
    %cst = arith.constant 0.000000e+00 : f32
    %2 = vector.broadcast %cst : f32 to vector<16x1xf32>
    %3 = vector.extract_strided_slice %1 {offsets = [0, 0], sizes = [240, 1], strides = [1, 1]} : vector<256x1xf32> to vector<240x1xf32>
    %4 = tpu.concatenate %2, %3 in 0 : vector<16x1xf32>, vector<240x1xf32> -> vector<256x1xf32>
    %5 = vector.extract_strided_slice %1 {offsets = [16, 0], sizes = [240, 1], strides = [1, 1]} : vector<256x1xf32> to vector<240x1xf32>
    %6 = tpu.concatenate %5, %2 in 0 : vector<240x1xf32>, vector<16x1xf32> -> vector<256x1xf32>
    %c0_2 = arith.constant 0 : index
    %c0_3 = arith.constant 0 : index
    %c0_4 = arith.constant 0 : index
    %7 = vector.load %arg2[%c0_2, %c0_3, %c0_4] : memref<3x1x64xf32, #tpu.memory_space<vmem>>, vector<1x1x64xf32>
    %8 = vector.shape_cast %7 : vector<1x1x64xf32> to vector<1x64xf32>
    %9 = vector.broadcast %4 : vector<256x1xf32> to vector<256x64xf32>
    %10 = vector.broadcast %8 : vector<1x64xf32> to vector<256x64xf32>
    %11 = arith.mulf %9, %10 : vector<256x64xf32>
    %c1 = arith.constant 1 : index
    %c0_5 = arith.constant 0 : index
    %c0_6 = arith.constant 0 : index
    %12 = vector.load %arg2[%c1, %c0_5, %c0_6] : memref<3x1x64xf32, #tpu.memory_space<vmem>>, vector<1x1x64xf32>
    %13 = vector.shape_cast %12 : vector<1x1x64xf32> to vector<1x64xf32>
    %14 = vector.broadcast %1 : vector<256x1xf32> to vector<256x64xf32>
    %15 = vector.broadcast %13 : vector<1x64xf32> to vector<256x64xf32>
    %16 = arith.mulf %14, %15 : vector<256x64xf32>
    %17 = arith.addf %11, %16 : vector<256x64xf32>
    %c2 = arith.constant 2 : index
    %c0_7 = arith.constant 0 : index
    %c0_8 = arith.constant 0 : index
    %18 = vector.load %arg2[%c2, %c0_7, %c0_8] : memref<3x1x64xf32, #tpu.memory_space<vmem>>, vector<1x1x64xf32>
    %19 = vector.shape_cast %18 : vector<1x1x64xf32> to vector<1x64xf32>
    %20 = vector.broadcast %6 : vector<256x1xf32> to vector<256x64xf32>
    %21 = vector.broadcast %19 : vector<1x64xf32> to vector<256x64xf32>
    %22 = arith.mulf %20, %21 : vector<256x64xf32>
    %23 = arith.addf %17, %22 : vector<256x64xf32>
    %c0_9 = arith.constant 0 : index
    %c0_10 = arith.constant 0 : index
    %24 = vector.load %arg3[%c0_9, %c0_10] : memref<1x64xf32, #tpu.memory_space<vmem>>, vector<1x64xf32>
    %25 = vector.broadcast %24 : vector<1x64xf32> to vector<256x64xf32>
    %26 = arith.addf %23, %25 : vector<256x64xf32>
    %cst_11 = arith.constant 0.000000e+00 : f32
    %27 = vector.broadcast %cst_11 : f32 to vector<256x64xf32>
    %28 = arith.maximumf %26, %27 : vector<256x64xf32>
    %29 = arith.truncf %28 : vector<256x64xf32> to vector<256x64xbf16>
    %cst_12 = arith.constant 0.000000e+00 : bf16
    %30 = vector.broadcast %cst_12 : bf16 to vector<16x64xbf16>
    %31 = vector.extract_strided_slice %29 {offsets = [0, 0], sizes = [240, 64], strides = [1, 1]} : vector<256x64xbf16> to vector<240x64xbf16>
    %32 = tpu.concatenate %30, %31 in 0 : vector<16x64xbf16>, vector<240x64xbf16> -> vector<256x64xbf16>
    %33 = vector.extract_strided_slice %29 {offsets = [16, 0], sizes = [240, 64], strides = [1, 1]} : vector<256x64xbf16> to vector<240x64xbf16>
    %34 = tpu.concatenate %33, %30 in 0 : vector<240x64xbf16>, vector<16x64xbf16> -> vector<256x64xbf16>
    %35 = tpu.concatenate %32, %29, %34 in 1 : vector<256x64xbf16>, vector<256x64xbf16>, vector<256x64xbf16> -> vector<256x192xbf16>
    %c0_13 = arith.constant 0 : index
    %c0_14 = arith.constant 0 : index
    %36 = vector.load %arg4[%c0_13, %c0_14] : memref<192x64xbf16, #tpu.memory_space<vmem>>, vector<192x64xbf16>
    %cst_15 = arith.constant dense<0.000000e+00> : vector<256x64xf32>
    %37 = tpu.matmul %35, %36, %cst_15 {dimension_numbers = #tpu.dot_dimension_numbers<[1], [0], [0], [1], [0, 0, 1, 1], [], []>} : vector<256x192xbf16>, vector<192x64xbf16>, vector<256x64xf32> -> vector<256x64xf32>
    %c0_16 = arith.constant 0 : index
    %c0_17 = arith.constant 0 : index
    %38 = vector.load %arg5[%c0_16, %c0_17] : memref<1x64xf32, #tpu.memory_space<vmem>>, vector<1x64xf32>
    %39 = vector.broadcast %38 : vector<1x64xf32> to vector<256x64xf32>
    %40 = arith.addf %37, %39 : vector<256x64xf32>
    %cst_18 = arith.constant 0.000000e+00 : f32
    %41 = vector.broadcast %cst_18 : f32 to vector<256x64xf32>
    %42 = arith.maximumf %40, %41 : vector<256x64xf32>
    %43 = arith.truncf %42 : vector<256x64xf32> to vector<256x64xbf16>
    %cst_19 = arith.constant 0.000000e+00 : bf16
    %44 = vector.broadcast %cst_19 : bf16 to vector<16x64xbf16>
    %45 = vector.extract_strided_slice %43 {offsets = [0, 0], sizes = [240, 64], strides = [1, 1]} : vector<256x64xbf16> to vector<240x64xbf16>
    %46 = tpu.concatenate %44, %45 in 0 : vector<16x64xbf16>, vector<240x64xbf16> -> vector<256x64xbf16>
    %47 = vector.extract_strided_slice %43 {offsets = [16, 0], sizes = [240, 64], strides = [1, 1]} : vector<256x64xbf16> to vector<240x64xbf16>
    %48 = tpu.concatenate %47, %44 in 0 : vector<240x64xbf16>, vector<16x64xbf16> -> vector<256x64xbf16>
    %49 = tpu.concatenate %46, %43, %48 in 1 : vector<256x64xbf16>, vector<256x64xbf16>, vector<256x64xbf16> -> vector<256x192xbf16>
    %c0_20 = arith.constant 0 : index
    %c0_21 = arith.constant 0 : index
    %50 = vector.load %arg6[%c0_20, %c0_21] : memref<192x64xbf16, #tpu.memory_space<vmem>>, vector<192x64xbf16>
    %cst_22 = arith.constant dense<0.000000e+00> : vector<256x64xf32>
    %51 = tpu.matmul %49, %50, %cst_22 {dimension_numbers = #tpu.dot_dimension_numbers<[1], [0], [0], [1], [0, 0, 1, 1], [], []>} : vector<256x192xbf16>, vector<192x64xbf16>, vector<256x64xf32> -> vector<256x64xf32>
    %c0_23 = arith.constant 0 : index
    %c0_24 = arith.constant 0 : index
    %52 = vector.load %arg7[%c0_23, %c0_24] : memref<1x64xf32, #tpu.memory_space<vmem>>, vector<1x64xf32>
    %53 = vector.broadcast %52 : vector<1x64xf32> to vector<256x64xf32>
    %54 = arith.addf %51, %53 : vector<256x64xf32>
    %cst_25 = arith.constant 0.000000e+00 : f32
    %55 = vector.broadcast %cst_25 : f32 to vector<256x64xf32>
    %56 = arith.maximumf %54, %55 : vector<256x64xf32>
    %57 = arith.truncf %56 : vector<256x64xf32> to vector<256x64xbf16>
    %cst_26 = arith.constant 0.000000e+00 : bf16
    %58 = vector.broadcast %cst_26 : bf16 to vector<16x64xbf16>
    %59 = vector.extract_strided_slice %57 {offsets = [0, 0], sizes = [240, 64], strides = [1, 1]} : vector<256x64xbf16> to vector<240x64xbf16>
    %60 = tpu.concatenate %58, %59 in 0 : vector<16x64xbf16>, vector<240x64xbf16> -> vector<256x64xbf16>
    %61 = vector.extract_strided_slice %57 {offsets = [16, 0], sizes = [240, 64], strides = [1, 1]} : vector<256x64xbf16> to vector<240x64xbf16>
    %62 = tpu.concatenate %61, %58 in 0 : vector<240x64xbf16>, vector<16x64xbf16> -> vector<256x64xbf16>
    %63 = tpu.concatenate %60, %57, %62 in 1 : vector<256x64xbf16>, vector<256x64xbf16>, vector<256x64xbf16> -> vector<256x192xbf16>
    %c0_27 = arith.constant 0 : index
    %c0_28 = arith.constant 0 : index
    %64 = vector.load %arg8[%c0_27, %c0_28] : memref<192x64xbf16, #tpu.memory_space<vmem>>, vector<192x64xbf16>
    %cst_29 = arith.constant dense<0.000000e+00> : vector<256x64xf32>
    %65 = tpu.matmul %63, %64, %cst_29 {dimension_numbers = #tpu.dot_dimension_numbers<[1], [0], [0], [1], [0, 0, 1, 1], [], []>} : vector<256x192xbf16>, vector<192x64xbf16>, vector<256x64xf32> -> vector<256x64xf32>
    %c0_30 = arith.constant 0 : index
    %c0_31 = arith.constant 0 : index
    %66 = vector.load %arg9[%c0_30, %c0_31] : memref<1x64xf32, #tpu.memory_space<vmem>>, vector<1x64xf32>
    %67 = vector.broadcast %66 : vector<1x64xf32> to vector<256x64xf32>
    %68 = arith.addf %65, %67 : vector<256x64xf32>
    %cst_32 = arith.constant 0.000000e+00 : f32
    %69 = vector.broadcast %cst_32 : f32 to vector<256x64xf32>
    %70 = arith.maximumf %68, %69 : vector<256x64xf32>
    %71 = arith.truncf %70 : vector<256x64xf32> to vector<256x64xbf16>
    %72 = vector.extract_strided_slice %71 {offsets = [0, 0], sizes = [16, 64], strides = [1, 1]} : vector<256x64xbf16> to vector<16x64xbf16>
    %73 = vector.extract_strided_slice %71 {offsets = [16, 0], sizes = [16, 64], strides = [1, 1]} : vector<256x64xbf16> to vector<16x64xbf16>
    %74 = vector.extract_strided_slice %71 {offsets = [32, 0], sizes = [16, 64], strides = [1, 1]} : vector<256x64xbf16> to vector<16x64xbf16>
    %75 = vector.extract_strided_slice %71 {offsets = [48, 0], sizes = [16, 64], strides = [1, 1]} : vector<256x64xbf16> to vector<16x64xbf16>
    %76 = vector.extract_strided_slice %71 {offsets = [64, 0], sizes = [16, 64], strides = [1, 1]} : vector<256x64xbf16> to vector<16x64xbf16>
    %77 = vector.extract_strided_slice %71 {offsets = [80, 0], sizes = [16, 64], strides = [1, 1]} : vector<256x64xbf16> to vector<16x64xbf16>
    %78 = vector.extract_strided_slice %71 {offsets = [96, 0], sizes = [16, 64], strides = [1, 1]} : vector<256x64xbf16> to vector<16x64xbf16>
    %79 = vector.extract_strided_slice %71 {offsets = [112, 0], sizes = [16, 64], strides = [1, 1]} : vector<256x64xbf16> to vector<16x64xbf16>
    %80 = vector.extract_strided_slice %71 {offsets = [128, 0], sizes = [16, 64], strides = [1, 1]} : vector<256x64xbf16> to vector<16x64xbf16>
    %81 = vector.extract_strided_slice %71 {offsets = [144, 0], sizes = [16, 64], strides = [1, 1]} : vector<256x64xbf16> to vector<16x64xbf16>
    %82 = vector.extract_strided_slice %71 {offsets = [160, 0], sizes = [16, 64], strides = [1, 1]} : vector<256x64xbf16> to vector<16x64xbf16>
    %83 = vector.extract_strided_slice %71 {offsets = [176, 0], sizes = [16, 64], strides = [1, 1]} : vector<256x64xbf16> to vector<16x64xbf16>
    %84 = vector.extract_strided_slice %71 {offsets = [192, 0], sizes = [16, 64], strides = [1, 1]} : vector<256x64xbf16> to vector<16x64xbf16>
    %85 = vector.extract_strided_slice %71 {offsets = [208, 0], sizes = [16, 64], strides = [1, 1]} : vector<256x64xbf16> to vector<16x64xbf16>
    %86 = vector.extract_strided_slice %71 {offsets = [224, 0], sizes = [16, 64], strides = [1, 1]} : vector<256x64xbf16> to vector<16x64xbf16>
    %87 = vector.extract_strided_slice %71 {offsets = [240, 0], sizes = [16, 64], strides = [1, 1]} : vector<256x64xbf16> to vector<16x64xbf16>
    %88 = tpu.concatenate %72, %73, %74, %75, %76, %77, %78, %79, %80, %81, %82, %83, %84, %85, %86, %87 in 1 : vector<16x64xbf16>, vector<16x64xbf16>, vector<16x64xbf16>, vector<16x64xbf16>, vector<16x64xbf16>, vector<16x64xbf16>, vector<16x64xbf16>, vector<16x64xbf16>, vector<16x64xbf16>, vector<16x64xbf16>, vector<16x64xbf16>, vector<16x64xbf16>, vector<16x64xbf16>, vector<16x64xbf16>, vector<16x64xbf16>, vector<16x64xbf16> -> vector<16x1024xbf16>
    %c0_33 = arith.constant 0 : index
    %c0_34 = arith.constant 0 : index
    %89 = vector.load %arg10[%c0_33, %c0_34] : memref<1024x16xbf16, #tpu.memory_space<vmem>>, vector<1024x16xbf16>
    %cst_35 = arith.constant dense<0.000000e+00> : vector<16x16xf32>
    %90 = tpu.matmul %88, %89, %cst_35 {dimension_numbers = #tpu.dot_dimension_numbers<[1], [0], [0], [1], [0, 0, 1, 1], [], []>} : vector<16x1024xbf16>, vector<1024x16xbf16>, vector<16x16xf32> -> vector<16x16xf32>
    %c0_36 = arith.constant 0 : index
    %c0_37 = arith.constant 0 : index
    %91 = vector.load %arg11[%c0_36, %c0_37] : memref<1x16xf32, #tpu.memory_space<vmem>>, vector<1x16xf32>
    %92 = vector.broadcast %91 : vector<1x16xf32> to vector<16x16xf32>
    %93 = arith.addf %90, %92 : vector<16x16xf32>
    %c0_38 = arith.constant 0 : index
    %c0_39 = arith.constant 0 : index
    %c0_40 = arith.constant 0 : index
    %94 = vector.load %arg12[%c0_38, %c0_39, %c0_40] : memref<1x16x16xf32, #tpu.memory_space<vmem>>, vector<1x16x16xf32>
    %95 = vector.shape_cast %94 : vector<1x16x16xf32> to vector<16x16xf32>
    %96 = vector.shape_cast %93 : vector<16x16xf32> to vector<1x16x16xf32>
    tpu.vector_store %arg12[%c0_38, %c0_39, %c0_40], %96 {strides = array<i32>} : memref<1x16x16xf32, #tpu.memory_space<vmem>>, vector<1x16x16xf32>,
    return
  }
  func.func @transform_0(%arg0: i32) -> (i32, i32, i32) {
    %c0_i32 = arith.constant 0 : i32
    %c0_i32_0 = arith.constant 0 : i32
    %c0_i32_1 = arith.constant 0 : i32
    return %arg0, %c0_i32, %c0_i32_0 : i32, i32, i32
  }
  func.func @transform_1(%arg0: i32) -> (i32, i32, i32) {
    %c0_i32 = arith.constant 0 : i32
    %c0_i32_0 = arith.constant 0 : i32
    %c0_i32_1 = arith.constant 0 : i32
    %c0_i32_2 = arith.constant 0 : i32
    return %c0_i32, %c0_i32_0, %c0_i32_1 : i32, i32, i32
  }
  func.func @transform_2(%arg0: i32) -> (i32, i32) {
    %c0_i32 = arith.constant 0 : i32
    %c0_i32_0 = arith.constant 0 : i32
    %c0_i32_1 = arith.constant 0 : i32
    return %c0_i32, %c0_i32_0 : i32, i32
  }
  func.func @transform_3(%arg0: i32) -> (i32, i32) {
    %c0_i32 = arith.constant 0 : i32
    %c0_i32_0 = arith.constant 0 : i32
    %c0_i32_1 = arith.constant 0 : i32
    return %c0_i32, %c0_i32_0 : i32, i32
  }
  func.func @transform_4(%arg0: i32) -> (i32, i32) {
    %c0_i32 = arith.constant 0 : i32
    %c0_i32_0 = arith.constant 0 : i32
    %c0_i32_1 = arith.constant 0 : i32
    return %c0_i32, %c0_i32_0 : i32, i32
  }
  func.func @transform_5(%arg0: i32) -> (i32, i32) {
    %c0_i32 = arith.constant 0 : i32
    %c0_i32_0 = arith.constant 0 : i32
    %c0_i32_1 = arith.constant 0 : i32
    return %c0_i32, %c0_i32_0 : i32, i32
  }
  func.func @transform_6(%arg0: i32) -> (i32, i32) {
    %c0_i32 = arith.constant 0 : i32
    %c0_i32_0 = arith.constant 0 : i32
    %c0_i32_1 = arith.constant 0 : i32
    return %c0_i32, %c0_i32_0 : i32, i32
  }
  func.func @transform_7(%arg0: i32) -> (i32, i32) {
    %c0_i32 = arith.constant 0 : i32
    %c0_i32_0 = arith.constant 0 : i32
    %c0_i32_1 = arith.constant 0 : i32
    return %c0_i32, %c0_i32_0 : i32, i32
  }
  func.func @transform_8(%arg0: i32) -> (i32, i32) {
    %c0_i32 = arith.constant 0 : i32
    %c0_i32_0 = arith.constant 0 : i32
    %c0_i32_1 = arith.constant 0 : i32
    return %c0_i32, %c0_i32_0 : i32, i32
  }
  func.func @transform_9(%arg0: i32) -> (i32, i32) {
    %c0_i32 = arith.constant 0 : i32
    %c0_i32_0 = arith.constant 0 : i32
    %c0_i32_1 = arith.constant 0 : i32
    return %c0_i32, %c0_i32_0 : i32, i32
  }
  func.func @transform_10(%arg0: i32) -> (i32, i32) {
    %c0_i32 = arith.constant 0 : i32
    %c0_i32_0 = arith.constant 0 : i32
    %c0_i32_1 = arith.constant 0 : i32
    return %c0_i32, %c0_i32_0 : i32, i32
  }
  func.func @transform_11(%arg0: i32) -> (i32, i32, i32) {
    %c0_i32 = arith.constant 0 : i32
    %c0_i32_0 = arith.constant 0 : i32
    %c0_i32_1 = arith.constant 0 : i32
    return %arg0, %c0_i32, %c0_i32_0 : i32, i32, i32
  }
}

</mosaic_0001>

<llo_original>
// kernel: fwd.1
$region0: #{fwd.1}
  #allocation0 [shape = 'u32[]', space=smem, size = 0x4, offset = 0x4, fixed_abs, tag = 'smem constant byte address 0x4 - core index']
  #allocation1 [shape = 'u32[72,128]{1,0:T(1,128)}', space=vmem, size = 0x9000, scoped, tag = 'internal scratch']
  %s0 = inlined_call_operand.vmem [shape: f32[4,256,1], index: 0, kind: input, shape index: {}]
  %s1 = inlined_call_operand.vmem [shape: f32[3,1,64], index: 1, kind: input, shape index: {}]
  %s2 = inlined_call_operand.vmem [shape: f32[1,64], index: 2, kind: input, shape index: {}]
  %s3 = inlined_call_operand.vmem [shape: bf16[192,64], index: 3, kind: input, shape index: {}]
  %s4 = inlined_call_operand.vmem [shape: f32[1,64], index: 4, kind: input, shape index: {}]
  %s5 = inlined_call_operand.vmem [shape: bf16[192,64], index: 5, kind: input, shape index: {}]
  %s6 = inlined_call_operand.vmem [shape: f32[1,64], index: 6, kind: input, shape index: {}]
  %s7 = inlined_call_operand.vmem [shape: bf16[192,64], index: 7, kind: input, shape index: {}]
  %s8 = inlined_call_operand.vmem [shape: f32[1,64], index: 8, kind: input, shape index: {}]
  %s9 = inlined_call_operand.vmem [shape: bf16[1024,16], index: 9, kind: input, shape index: {}]
  %s10 = inlined_call_operand.vmem [shape: f32[1,16], index: 10, kind: input, shape index: {}]
  %s11 = inlined_call_operand.vmem [shape: f32[4,16,16], index: 11, kind: output, shape index: {}]
  %s12 = sld [smem:[#allocation0]]
  $region77: #{fwd.1} parent=0
    _
  %s14 = ssub.s32 1, %s12
  %s15 = scalar_select 0, %s14, %s12
  loop: start=0, step=1, limit=6
  $region2: #{fwd.1} parent=0 // loop_pre_header
    _
  $region3: #{fwd.1} parent=0 // loop_header
    %s17 = sphi 0, %s21
    %p18 = scmp.ge.s32.totalorder %s17, 6
    %s27 = sphi 0, %s29
    %s30 = sphi 0, %s27
    %s31 = sphi 0, %s30
    %s47 = sphi 0, %s31
    %s51 = sphi 0, %s51
    %s53 = sphi 0, %s51
    %s54 = sphi 0, %s53
    %s68 = sphi 0, %s54
    %s72 = sphi 0, %s72
    %s74 = sphi 0, %s72
    %s75 = sphi 0, %s74
    %s89 = sphi 0, %s75
    %s93 = sphi 0, %s93
    %s95 = sphi 0, %s93
    %s96 = sphi 0, %s95
    %s110 = sphi 0, %s96
    %s114 = sphi 0, %s114
    %s116 = sphi 0, %s114
    %s117 = sphi 0, %s116
    %s131 = sphi 0, %s117
    %s135 = sphi 0, %s135
    %s137 = sphi 0, %s135
    %s138 = sphi 0, %s137
    %s152 = sphi 0, %s138
    %s156 = sphi 0, %s156
    %s158 = sphi 0, %s156
    %s159 = sphi 0, %s158
    %s173 = sphi 0, %s159
    %s177 = sphi 0, %s177
    %s179 = sphi 0, %s177
    %s180 = sphi 0, %s179
    %s194 = sphi 0, %s180
    %s198 = sphi 0, %s198
    %s200 = sphi 0, %s198
    %s201 = sphi 0, %s200
    %s215 = sphi 0, %s201
    %s219 = sphi 0, %s219
    %s221 = sphi 0, %s219
    %s222 = sphi 0, %s221
    %s236 = sphi 0, %s222
    %s240 = sphi 0, %s240
    %s242 = sphi 0, %s240
    %s243 = sphi 0, %s242
    %s257 = sphi 0, %s243
    %s263 = sphi 0, %s265
    %s266 = sphi 0, %s263
    %s267 = sphi 0, %s266
    %s283 = sphi 0, %s267
  $region4: #{fwd.1} parent=0 // loop_header_branch
    %20 = sbr.rel (%p18) target = $region8
  $region5: #{fwd.1} parent=0 // loop_body
    %s22 = ssub.s32 %s17, 1
    %s23 = ssub.s32 %s17, 2
    %s24 = sadd.s32 %s17, 1
    %s25 = ssub.s32 %s17, %s24
    %p26 = scmp.eq.s32.totalorder %s25, 0
    %s28 = sadd.s32 %s27, 1
    %s29 = scalar_select %p26, %s27, %s28
    %p32 = pneg %p26
    %p33 = scmp.eq.s32.totalorder %s17, 3
    %p34 = por %p32, %p33
    %p35 = scmp.ne.s32.totalorder %s27, %s30
    %p36 = scmp.eq.s32.totalorder %s17, 0
    %p37 = por %p35, %p36
    %p38 = scmp.ne.s32.totalorder %s27, %s30
    %p39 = scmp.eq.s32.totalorder %s22, 3
    %p40 = por %p38, %p39
    %p41 = scmp.ne.s32.totalorder %s30, %s31
    %p42 = scmp.eq.s32.totalorder %s22, 0
    %p43 = por %p41, %p42
    %p44 = scmp.ne.s32.totalorder %s30, %s31
    %p45 = scmp.eq.s32.totalorder %s23, 3
    %p46 = por %p44, %p45
    %p48 = scmp.ne.s32.totalorder %s31, %s47
    %p49 = scmp.eq.s32.totalorder %s23, 0
    %p50 = por %p48, %p49
    %s52 = sadd.s32 %s51, 1
    %p55 = scmp.eq.s32.totalorder %s17, 3
    %p56 = scmp.ne.s32.totalorder %s51, %s53
    %p57 = scmp.eq.s32.totalorder %s17, 0
    %p58 = por %p56, %p57
    %p59 = scmp.ne.s32.totalorder %s51, %s53
    %p60 = scmp.eq.s32.totalorder %s22, 3
    %p61 = por %p59, %p60
    %p62 = scmp.ne.s32.totalorder %s53, %s54
    %p63 = scmp.eq.s32.totalorder %s22, 0
    %p64 = por %p62, %p63
    %p65 = scmp.ne.s32.totalorder %s53, %s54
    %p66 = scmp.eq.s32.totalorder %s23, 3
    %p67 = por %p65, %p66
    %p69 = scmp.ne.s32.totalorder %s54, %s68
    %p70 = scmp.eq.s32.totalorder %s23, 0
    %p71 = por %p69, %p70
    %s73 = sadd.s32 %s72, 1
    %p76 = scmp.eq.s32.totalorder %s17, 3
    %p77 = scmp.ne.s32.totalorder %s72, %s74
    %p78 = scmp.eq.s32.totalorder %s17, 0
    %p79 = por %p77, %p78
    %p80 = scmp.ne.s32.totalorder %s72, %s74
    %p81 = scmp.eq.s32.totalorder %s22, 3
    %p82 = por %p80, %p81
    %p83 = scmp.ne.s32.totalorder %s74, %s75
    %p84 = scmp.eq.s32.totalorder %s22, 0
    %p85 = por %p83, %p84
    %p86 = scmp.ne.s32.totalorder %s74, %s75
    %p87 = scmp.eq.s32.totalorder %s23, 3
    %p88 = por %p86, %p87
    %p90 = scmp.ne.s32.totalorder %s75, %s89
    %p91 = scmp.eq.s32.totalorder %s23, 0
    %p92 = por %p90, %p91
    %s94 = sadd.s32 %s93, 1
    %p97 = scmp.eq.s32.totalorder %s17, 3
    %p98 = scmp.ne.s32.totalorder %s93, %s95
    %p99 = scmp.eq.s32.totalorder %s17, 0
    %p100 = por %p98, %p99
    %p101 = scmp.ne.s32.totalorder %s93, %s95
    %p102 = scmp.eq.s32.totalorder %s22, 3
    %p103 = por %p101, %p102
    %p104 = scmp.ne.s32.totalorder %s95, %s96
    %p105 = scmp.eq.s32.totalorder %s22, 0
    %p106 = por %p104, %p105
    %p107 = scmp.ne.s32.totalorder %s95, %s96
    %p108 = scmp.eq.s32.totalorder %s23, 3
    %p109 = por %p107, %p108
    %p111 = scmp.ne.s32.totalorder %s96, %s110
    %p112 = scmp.eq.s32.totalorder %s23, 0
    %p113 = por %p111, %p112
    %s115 = sadd.s32 %s114, 1
    %p118 = scmp.eq.s32.totalorder %s17, 3
    %p119 = scmp.ne.s32.totalorder %s114, %s116
    %p120 = scmp.eq.s32.totalorder %s17, 0
    %p121 = por %p119, %p120
    %p122 = scmp.ne.s32.totalorder %s114, %s116
    %p123 = scmp.eq.s32.totalorder %s22, 3
    %p124 = por %p122, %p123
    %p125 = scmp.ne.s32.totalorder %s116, %s117
    %p126 = scmp.eq.s32.totalorder %s22, 0
    %p127 = por %p125, %p126
    %p128 = scmp.ne.s32.totalorder %s116, %s117
    %p129 = scmp.eq.s32.totalorder %s23, 3
    %p130 = por %p128, %p129
    %p132 = scmp.ne.s32.totalorder %s117, %s131
    %p133 = scmp.eq.s32.totalorder %s23, 0
    %p134 = por %p132, %p133
    %s136 = sadd.s32 %s135, 1
    %p139 = scmp.eq.s32.totalorder %s17, 3
    %p140 = scmp.ne.s32.totalorder %s135, %s137
    %p141 = scmp.eq.s32.totalorder %s17, 0
    %p142 = por %p140, %p141
    %p143 = scmp.ne.s32.totalorder %s135, %s137
    %p144 = scmp.eq.s32.totalorder %s22, 3
    %p145 = por %p143, %p144
    %p146 = scmp.ne.s32.totalorder %s137, %s138
    %p147 = scmp.eq.s32.totalorder %s22, 0
    %p148 = por %p146, %p147
    %p149 = scmp.ne.s32.totalorder %s137, %s138
    %p150 = scmp.eq.s32.totalorder %s23, 3
    %p151 = por %p149, %p150
    %p153 = scmp.ne.s32.totalorder %s138, %s152
    %p154 = scmp.eq.s32.totalorder %s23, 0
    %p155 = por %p153, %p154
    %s157 = sadd.s32 %s156, 1
    %p160 = scmp.eq.s32.totalorder %s17, 3
    %p161 = scmp.ne.s32.totalorder %s156, %s158
    %p162 = scmp.eq.s32.totalorder %s17, 0
    %p163 = por %p161, %p162
    %p164 = scmp.ne.s32.totalorder %s156, %s158
    %p165 = scmp.eq.s32.totalorder %s22, 3
    %p166 = por %p164, %p165
    %p167 = scmp.ne.s32.totalorder %s158, %s159
    %p168 = scmp.eq.s32.totalorder %s22, 0
    %p169 = por %p167, %p168
    %p170 = scmp.ne.s32.totalorder %s158, %s159
    %p171 = scmp.eq.s32.totalorder %s23, 3
    %p172 = por %p170, %p171
    %p174 = scmp.ne.s32.totalorder %s159, %s173
    %p175 = scmp.eq.s32.totalorder %s23, 0
    %p176 = por %p174, %p175
    %s178 = sadd.s32 %s177, 1
    %p181 = scmp.eq.s32.totalorder %s17, 3
    %p182 = scmp.ne.s32.totalorder %s177, %s179
    %p183 = scmp.eq.s32.totalorder %s17, 0
    %p184 = por %p182, %p183
    %p185 = scmp.ne.s32.totalorder %s177, %s179
    %p186 = scmp.eq.s32.totalorder %s22, 3
    %p187 = por %p185, %p186
    %p188 = scmp.ne.s32.totalorder %s179, %s180
    %p189 = scmp.eq.s32.totalorder %s22, 0
    %p190 = por %p188, %p189
    %p191 = scmp.ne.s32.totalorder %s179, %s180
    %p192 = scmp.eq.s32.totalorder %s23, 3
    %p193 = por %p191, %p192
    %p195 = scmp.ne.s32.totalorder %s180, %s194
    %p196 = scmp.eq.s32.totalorder %s23, 0
    %p197 = por %p195, %p196
    %s199 = sadd.s32 %s198, 1
    %p202 = scmp.eq.s32.totalorder %s17, 3
    %p203 = scmp.ne.s32.totalorder %s198, %s200
    %p204 = scmp.eq.s32.totalorder %s17, 0
    %p205 = por %p203, %p204
    %p206 = scmp.ne.s32.totalorder %s198, %s200
    %p207 = scmp.eq.s32.totalorder %s22, 3
    %p208 = por %p206, %p207
    %p209 = scmp.ne.s32.totalorder %s200, %s201
    %p210 = scmp.eq.s32.totalorder %s22, 0
    %p211 = por %p209, %p210
    %p212 = scmp.ne.s32.totalorder %s200, %s201
    %p213 = scmp.eq.s32.totalorder %s23, 3
    %p214 = por %p212, %p213
    %p216 = scmp.ne.s32.totalorder %s201, %s215
    %p217 = scmp.eq.s32.totalorder %s23, 0
    %p218 = por %p216, %p217
    %s220 = sadd.s32 %s219, 1
    %p223 = scmp.eq.s32.totalorder %s17, 3
    %p224 = scmp.ne.s32.totalorder %s219, %s221
    %p225 = scmp.eq.s32.totalorder %s17, 0
    %p226 = por %p224, %p225
    %p227 = scmp.ne.s32.totalorder %s219, %s221
    %p228 = scmp.eq.s32.totalorder %s22, 3
    %p229 = por %p227, %p228
    %p230 = scmp.ne.s32.totalorder %s221, %s222
    %p231 = scmp.eq.s32.totalorder %s22, 0
    %p232 = por %p230, %p231
    %p233 = scmp.ne.s32.totalorder %s221, %s222
    %p234 = scmp.eq.s32.totalorder %s23, 3
    %p235 = por %p233, %p234
    %p237 = scmp.ne.s32.totalorder %s222, %s236
    %p238 = scmp.eq.s32.totalorder %s23, 0
    %p239 = por %p237, %p238
    %s241 = sadd.s32 %s240, 1
    %p244 = scmp.eq.s32.totalorder %s17, 3
    %p245 = scmp.ne.s32.totalorder %s240, %s242
    %p246 = scmp.eq.s32.totalorder %s17, 0
    %p247 = por %p245, %p246
    %p248 = scmp.ne.s32.totalorder %s240, %s242
    %p249 = scmp.eq.s32.totalorder %s22, 3
    %p250 = por %p248, %p249
    %p251 = scmp.ne.s32.totalorder %s242, %s243
    %p252 = scmp.eq.s32.totalorder %s22, 0
    %p253 = por %p251, %p252
    %p254 = scmp.ne.s32.totalorder %s242, %s243
    %p255 = scmp.eq.s32.totalorder %s23, 3
    %p256 = por %p254, %p255
    %p258 = scmp.ne.s32.totalorder %s243, %s257
    %p259 = scmp.eq.s32.totalorder %s23, 0
    %p260 = por %p258, %p259
    %s261 = ssub.s32 %s17, %s24
    %p262 = scmp.eq.s32.totalorder %s261, 0
    %s264 = sadd.s32 %s263, 1
    %s265 = scalar_select %p262, %s263, %s264
    %p268 = pneg %p262
    %p269 = scmp.eq.s32.totalorder %s17, 3
    %p270 = por %p268, %p269
    %p271 = scmp.ne.s32.totalorder %s263, %s266
    %p272 = scmp.eq.s32.totalorder %s17, 0
    %p273 = por %p271, %p272
    %p274 = scmp.ne.s32.totalorder %s263, %s266
    %p275 = scmp.eq.s32.totalorder %s22, 3
    %p276 = por %p274, %p275
    %p277 = scmp.ne.s32.totalorder %s266, %s267
    %p278 = scmp.eq.s32.totalorder %s22, 0
    %p279 = por %p277, %p278
    %p280 = scmp.ne.s32.totalorder %s266, %s267
    %p281 = scmp.eq.s32.totalorder %s23, 3
    %p282 = por %p280, %p281
    %p284 = scmp.ne.s32.totalorder %s267, %s283
    %p285 = scmp.eq.s32.totalorder %s23, 0
    %p286 = por %p284, %p285
    %p287 = scmp.le.s32.totalorder 1, %s17
    %p288 = scmp.lt.s32.totalorder %s17, 5
    %p289 = pnand %p287, %p288
    %p290 = pneg %p289
    // Predicated region
    $region9: #{fwd.1} parent=5 // pred_check
      _
    $region10: #{fwd.1} parent=5 // pred_check_branch
      %292 = sbr.rel (%p289) target = $region12
    $region11: #{fwd.1} parent=5 // pred_region
      %s293 = ssub.s32 %s17, 1
      // Predicated region
      $region13: #{fwd.1} parent=11 // pred_check
        %p294 = pneg %p64
      $region14: #{fwd.1} parent=11 // pred_check_branch
        %296 = sbr.rel (%p294) target = $region16
      $region15: #{fwd.1} parent=11 // pred_region
        _
      $region16: #{fwd.1} parent=11 // pred_fallthru
        _
      // Predicated region
      $region17: #{fwd.1} parent=11 // pred_check
        %p297 = pneg %p85
      $region18: #{fwd.1} parent=11 // pred_check_branch
        %299 = sbr.rel (%p297) target = $region20
      $region19: #{fwd.1} parent=11 // pred_region
        _
      $region20: #{fwd.1} parent=11 // pred_fallthru
        _
      // Predicated region
      $region21: #{fwd.1} parent=11 // pred_check
        %p300 = pneg %p106
      $region22: #{fwd.1} parent=11 // pred_check_branch
        %302 = sbr.rel (%p300) target = $region24
      $region23: #{fwd.1} parent=11 // pred_region
        _
      $region24: #{fwd.1} parent=11 // pred_fallthru
        _
      // Predicated region
      $region25: #{fwd.1} parent=11 // pred_check
        %p303 = pneg %p127
      $region26: #{fwd.1} parent=11 // pred_check_branch
        %305 = sbr.rel (%p303) target = $region28
      $region27: #{fwd.1} parent=11 // pred_region
        _
      $region28: #{fwd.1} parent=11 // pred_fallthru
        _
      // Predicated region
      $region29: #{fwd.1} parent=11 // pred_check
        %p306 = pneg %p148
      $region30: #{fwd.1} parent=11 // pred_check_branch
        %308 = sbr.rel (%p306) target = $region32
      $region31: #{fwd.1} parent=11 // pred_region
        _
      $region32: #{fwd.1} parent=11 // pred_fallthru
        _
      // Predicated region
      $region33: #{fwd.1} parent=11 // pred_check
        %p309 = pneg %p169
      $region34: #{fwd.1} parent=11 // pred_check_branch
        %311 = sbr.rel (%p309) target = $region36
      $region35: #{fwd.1} parent=11 // pred_region
        _
      $region36: #{fwd.1} parent=11 // pred_fallthru
        _
      // Predicated region
      $region37: #{fwd.1} parent=11 // pred_check
        %p312 = pneg %p190
      $region38: #{fwd.1} parent=11 // pred_check_branch
        %314 = sbr.rel (%p312) target = $region40
      $region39: #{fwd.1} parent=11 // pred_region
        _
      $region40: #{fwd.1} parent=11 // pred_fallthru
        _
      // Predicated region
      $region41: #{fwd.1} parent=11 // pred_check
        %p315 = pneg %p211
      $region42: #{fwd.1} parent=11 // pred_check_branch
        %317 = sbr.rel (%p315) target = $region44
      $region43: #{fwd.1} parent=11 // pred_region
        _
      $region44: #{fwd.1} parent=11 // pred_fallthru
        _
      // Predicated region
      $region45: #{fwd.1} parent=11 // pred_check
        %p318 = pneg %p232
      $region46: #{fwd.1} parent=11 // pred_check_branch
        %320 = sbr.rel (%p318) target = $region48
      $region47: #{fwd.1} parent=11 // pred_region
        _
      $region48: #{fwd.1} parent=11 // pred_fallthru
        _
      // Predicated region
      $region49: #{fwd.1} parent=11 // pred_check
        %p321 = pneg %p253
      $region50: #{fwd.1} parent=11 // pred_check_branch
        %323 = sbr.rel (%p321) target = $region52
      $region51: #{fwd.1} parent=11 // pred_region
        _
      $region52: #{fwd.1} parent=11 // pred_fallthru
        _
    $region12: #{fwd.1} parent=5 // pred_fallthru
      _
    %p324 = scmp.lt.s32.totalorder %s17, 4
    // Predicated region
    $region53: #{fwd.1} parent=5 // pred_check
      %p325 = pneg %p324
    $region54: #{fwd.1} parent=5 // pred_check_branch
      %327 = sbr.rel (%p325) target = $region56
    $region55: #{fwd.1} parent=5 // pred_region
      // Predicated region
      $region57: #{fwd.1} parent=55 // pred_check
        %p328 = pneg %p37
      $region58: #{fwd.1} parent=55 // pred_check_branch
        %330 = sbr.rel (%p328) target = $region60
      $region59: #{fwd.1} parent=55 // pred_region
        %p331 = scmp.lt.s32.totalorder %s17, 3
        %s332 = scalar_select %p331, %s17, 3
        %s333 = smul.addr %s332, 32
        %s334 = smul.addr %s333, 8
        %s335 = scalar_lea.vmem %s0, %s334
      $region60: #{fwd.1} parent=55 // pred_fallthru
        _
    $region56: #{fwd.1} parent=5 // pred_fallthru
      _
    %p336 = scmp.le.s32.totalorder 1, %s17
    %p337 = scmp.lt.s32.totalorder %s17, 5
    %p338 = pnand %p336, %p337
    %p339 = pneg %p338
    // Predicated region
    $region61: #{fwd.1} parent=5 // pred_check
      _
    $region62: #{fwd.1} parent=5 // pred_check_branch
      %341 = sbr.rel (%p338) target = $region64
    $region63: #{fwd.1} parent=5 // pred_region
      %s342 = ssub.s32 %s17, 1
      %p343 = scmp.lt.s32.totalorder %s22, 3
      %s344 = scalar_select %p343, %s22, 3
      %s345 = smul.addr %s344, 32
      %s346 = smul.addr %s345, 8
      %s347 = scalar_lea.vmem %s0, %s346
      %p348 = pneg %p43
      %p349 = pneg %p40
      %p350 = pneg %p64
      %p351 = pneg %p61
      %p352 = pneg %p85
      %p353 = pneg %p82
      %p354 = pneg %p106
      %p355 = pneg %p103
      %p356 = pneg %p127
      %p357 = pneg %p124
      %p358 = pneg %p148
      %p359 = pneg %p145
      %p360 = pneg %p169
      %p361 = pneg %p166
      %p362 = pneg %p190
      %p363 = pneg %p187
      %p364 = pneg %p211
      %p365 = pneg %p208
      %p366 = pneg %p232
      %p367 = pneg %p229
      %p368 = pneg %p253
      %p369 = pneg %p250
      %p370 = pneg %p279
      %p371 = pneg %p276
      %p372 = scmp.lt.s32.totalorder %s22, 3
      %s373 = scalar_select %p372, %s22, 3
      %s374 = smul.addr %s373, 2
      %s375 = smul.addr %s374, 8
      %s376 = scalar_lea.vmem %s11, %s375
      %p377 = scmp.lt.s32.totalorder %s22, 3
      %s378 = scalar_select %p377, %s22, 3
      %s379 = smul.addr %s378, 32
      %s380 = smul.addr %s379, 8
      %s381 = scalar_lea.vmem %s0, %s380
      %p382 = scmp.lt.s32.totalorder %s22, 3
      %s383 = scalar_select %p382, %s22, 3
      %s384 = smul.addr %s383, 2
      %s385 = smul.addr %s384, 8
      %s386 = scalar_lea.vmem %s11, %s385
      %v388 = vld [vmem:[%s381] sm:$0xff]
      %v389 = vld [vmem:[%s381 + $0x8] sm:$0xff]
      %v390 = vld [vmem:[%s381 + $0x10] sm:$0xff]
      %v391 = vld [vmem:[%s381 + $0x18] sm:$0xff]
      %v392 = vld [vmem:[%s381 + $0x20] sm:$0xff]
      %v393 = vld [vmem:[%s381 + $0x28] sm:$0xff]
      %v394 = vld [vmem:[%s381 + $0x30] sm:$0xff]
      %v395 = vld [vmem:[%s381 + $0x38] sm:$0xff]
      %v396 = vld [vmem:[%s381 + $0x40] sm:$0xff]
      %v397 = vld [vmem:[%s381 + $0x48] sm:$0xff]
      %v398 = vld [vmem:[%s381 + $0x50] sm:$0xff]
      %v399 = vld [vmem:[%s381 + $0x58] sm:$0xff]
      %v400 = vld [vmem:[%s381 + $0x60] sm:$0xff]
      %v401 = vld [vmem:[%s381 + $0x68] sm:$0xff]
      %v402 = vld [vmem:[%s381 + $0x70] sm:$0xff]
      %v403 = vld [vmem:[%s381 + $0x78] sm:$0xff]
      %v404 = vld [vmem:[%s381 + $0x80] sm:$0xff]
      %v405 = vld [vmem:[%s381 + $0x88] sm:$0xff]
      %v406 = vld [vmem:[%s381 + $0x90] sm:$0xff]
      %v407 = vld [vmem:[%s381 + $0x98] sm:$0xff]
      %v408 = vld [vmem:[%s381 + $0xa0] sm:$0xff]
      %v409 = vld [vmem:[%s381 + $0xa8] sm:$0xff]
      %v410 = vld [vmem:[%s381 + $0xb0] sm:$0xff]
      %v411 = vld [vmem:[%s381 + $0xb8] sm:$0xff]
      %v412 = vld [vmem:[%s381 + $0xc0] sm:$0xff]
      %v413 = vld [vmem:[%s381 + $0xc8] sm:$0xff]
      %v414 = vld [vmem:[%s381 + $0xd0] sm:$0xff]
      %v415 = vld [vmem:[%s381 + $0xd8] sm:$0xff]
      %v416 = vld [vmem:[%s381 + $0xe0] sm:$0xff]
      %v417 = vld [vmem:[%s381 + $0xe8] sm:$0xff]
      %v418 = vld [vmem:[%s381 + $0xf0] sm:$0xff]
      %v419 = vld [vmem:[%s381 + $0xf8] sm:$0xff]
      %v420 = vld [vmem:[%s1] sm:$0x1]
      %422 = vset.pattern.permute.xlu0 0
      %423 = vperm.xlu0 %422, 0.0
      %v424 = vpop.permute.xlu0 %423
      %427 = vset.pattern.permute.xlu0 0
      %428 = vperm.xlu0 %427, %v388
      %v429 = vpop.permute.xlu0 %428
      %432 = vset.pattern.permute.xlu0 0
      %433 = vperm.xlu0 %432, %v389
      %v434 = vpop.permute.xlu0 %433
      %437 = vset.pattern.permute.xlu0 0
      %438 = vperm.xlu0 %437, %v390
      %v439 = vpop.permute.xlu0 %438
      %442 = vset.pattern.permute.xlu0 0
      %443 = vperm.xlu0 %442, %v391
      %v444 = vpop.permute.xlu0 %443
      %447 = vset.pattern.permute.xlu0 0
      %448 = vperm.xlu0 %447, %v392
      %v449 = vpop.permute.xlu0 %448
      %452 = vset.pattern.permute.xlu0 0
      %453 = vperm.xlu0 %452, %v393
      %v454 = vpop.permute.xlu0 %453
      %457 = vset.pattern.permute.xlu0 0
      %458 = vperm.xlu0 %457, %v394
      %v459 = vpop.permute.xlu0 %458
      %462 = vset.pattern.permute.xlu0 0
      %463 = vperm.xlu0 %462, %v395
      %v464 = vpop.permute.xlu0 %463
      %467 = vset.pattern.permute.xlu0 0
      %468 = vperm.xlu0 %467, %v396
      %v469 = vpop.permute.xlu0 %468
      %472 = vset.pattern.permute.xlu0 0
      %473 = vperm.xlu0 %472, %v397
      %v474 = vpop.permute.xlu0 %473
      %477 = vset.pattern.permute.xlu0 0
      %478 = vperm.xlu0 %477, %v398
      %v479 = vpop.permute.xlu0 %478
      %482 = vset.pattern.permute.xlu0 0
      %483 = vperm.xlu0 %482, %v399
      %v484 = vpop.permute.xlu0 %483
      %487 = vset.pattern.permute.xlu0 0
      %488 = vperm.xlu0 %487, %v400
      %v489 = vpop.permute.xlu0 %488
      %492 = vset.pattern.permute.xlu0 0
      %493 = vperm.xlu0 %492, %v401
      %v494 = vpop.permute.xlu0 %493
      %497 = vset.pattern.permute.xlu0 0
      %498 = vperm.xlu0 %497, %v402
      %v499 = vpop.permute.xlu0 %498
      %502 = vset.pattern.permute.xlu0 0
      %503 = vperm.xlu0 %502, %v403
      %v504 = vpop.permute.xlu0 %503
      %507 = vset.pattern.permute.xlu0 0
      %508 = vperm.xlu0 %507, %v404
      %v509 = vpop.permute.xlu0 %508
      %512 = vset.pattern.permute.xlu0 0
      %513 = vperm.xlu0 %512, %v405
      %v514 = vpop.permute.xlu0 %513
      %517 = vset.pattern.permute.xlu0 0
      %518 = vperm.xlu0 %517, %v406
      %v519 = vpop.permute.xlu0 %518
      %522 = vset.pattern.permute.xlu0 0
      %523 = vperm.xlu0 %522, %v407
      %v524 = vpop.permute.xlu0 %523
      %527 = vset.pattern.permute.xlu0 0
      %528 = vperm.xlu0 %527, %v408
      %v529 = vpop.permute.xlu0 %528
      %532 = vset.pattern.permute.xlu0 0
      %533 = vperm.xlu0 %532, %v409
      %v534 = vpop.permute.xlu0 %533
      %537 = vset.pattern.permute.xlu0 0
      %538 = vperm.xlu0 %537, %v410
      %v539 = vpop.permute.xlu0 %538
      %542 = vset.pattern.permute.xlu0 0
      %543 = vperm.xlu0 %542, %v411
      %v544 = vpop.permute.xlu0 %543
      %547 = vset.pattern.permute.xlu0 0
      %548 = vperm.xlu0 %547, %v412
      %v549 = vpop.permute.xlu0 %548
      %552 = vset.pattern.permute.xlu0 0
      %553 = vperm.xlu0 %552, %v413
      %v554 = vpop.permute.xlu0 %553
      %557 = vset.pattern.permute.xlu0 0
      %558 = vperm.xlu0 %557, %v414
      %v559 = vpop.permute.xlu0 %558
      %562 = vset.pattern.permute.xlu0 0
      %563 = vperm.xlu0 %562, %v415
      %v564 = vpop.permute.xlu0 %563
      %567 = vset.pattern.permute.xlu0 0
      %568 = vperm.xlu0 %567, %v416
      %v569 = vpop.permute.xlu0 %568
      %572 = vset.pattern.permute.xlu0 0
      %573 = vperm.xlu0 %572, %v417
      %v574 = vpop.permute.xlu0 %573
      %v577 = vperm.slane %v420, 0
      %v579 = vmul.f32 %v424, %v577
      %v580 = vmul.f32 %v429, %v577
      %v581 = vmul.f32 %v434, %v577
      %v582 = vmul.f32 %v439, %v577
      %v583 = vmul.f32 %v444, %v577
      %v584 = vmul.f32 %v449, %v577
      %v585 = vmul.f32 %v454, %v577
      %v586 = vmul.f32 %v459, %v577
      %v587 = vmul.f32 %v464, %v577
      %v588 = vmul.f32 %v469, %v577
      %v589 = vmul.f32 %v474, %v577
      %v590 = vmul.f32 %v479, %v577
      %v591 = vmul.f32 %v484, %v577
      %v592 = vmul.f32 %v489, %v577
      %v593 = vmul.f32 %v494, %v577
      %v594 = vmul.f32 %v499, %v577
      %v595 = vmul.f32 %v504, %v577
      %v596 = vmul.f32 %v509, %v577
      %v597 = vmul.f32 %v514, %v577
      %v598 = vmul.f32 %v519, %v577
      %v599 = vmul.f32 %v524, %v577
      %v600 = vmul.f32 %v529, %v577
      %v601 = vmul.f32 %v534, %v577
      %v602 = vmul.f32 %v539, %v577
      %v603 = vmul.f32 %v544, %v577
      %v604 = vmul.f32 %v549, %v577
      %v605 = vmul.f32 %v554, %v577
      %v606 = vmul.f32 %v559, %v577
      %v607 = vmul.f32 %v564, %v577
      %v608 = vmul.f32 %v569, %v577
      %v609 = vmul.f32 %v574, %v577
      %s610 = scalar_lea.vmem %s1, 1
      %v611 = vld [vmem:[%s610] sm:$0x1]
      %613 = vset.pattern.permute.xlu0 0
      %614 = vperm.xlu0 %613, %v418
      %v615 = vpop.permute.xlu0 %614
      %618 = vset.pattern.permute.xlu0 0
      %619 = vperm.xlu0 %618, %v419
      %v620 = vpop.permute.xlu0 %619
      %v623 = vperm.slane %v611, 0
      %v625 = vmul.f32 %v429, %v623
      %v626 = vmul.f32 %v434, %v623
      %v627 = vmul.f32 %v439, %v623
      %v628 = vmul.f32 %v444, %v623
      %v629 = vmul.f32 %v449, %v623
      %v630 = vmul.f32 %v454, %v623
      %v631 = vmul.f32 %v459, %v623
      %v632 = vmul.f32 %v464, %v623
      %v633 = vmul.f32 %v469, %v623
      %v634 = vmul.f32 %v474, %v623
      %v635 = vmul.f32 %v479, %v623
      %v636 = vmul.f32 %v484, %v623
      %v637 = vmul.f32 %v489, %v623
      %v638 = vmul.f32 %v494, %v623
      %v639 = vmul.f32 %v499, %v623
      %v640 = vmul.f32 %v504, %v623
      %v641 = vmul.f32 %v509, %v623
      %v642 = vmul.f32 %v514, %v623
      %v643 = vmul.f32 %v519, %v623
      %v644 = vmul.f32 %v524, %v623
      %v645 = vmul.f32 %v529, %v623
      %v646 = vmul.f32 %v534, %v623
      %v647 = vmul.f32 %v539, %v623
      %v648 = vmul.f32 %v544, %v623
      %v649 = vmul.f32 %v549, %v623
      %v650 = vmul.f32 %v554, %v623
      %v651 = vmul.f32 %v559, %v623
      %v652 = vmul.f32 %v564, %v623
      %v653 = vmul.f32 %v569, %v623
      %v654 = vmul.f32 %v574, %v623
      %v655 = vmul.f32 %v615, %v623
      %v656 = vmul.f32 %v620, %v623
      %v657 = vadd.f32 %v579, %v625
      %v658 = vadd.f32 %v579, %v626
      %v659 = vadd.f32 %v580, %v627
      %v660 = vadd.f32 %v581, %v628
      %v661 = vadd.f32 %v582, %v629
      %v662 = vadd.f32 %v583, %v630
      %v663 = vadd.f32 %v584, %v631
      %v664 = vadd.f32 %v585, %v632
      %v665 = vadd.f32 %v586, %v633
      %v666 = vadd.f32 %v587, %v634
      %v667 = vadd.f32 %v588, %v635
      %v668 = vadd.f32 %v589, %v636
      %v669 = vadd.f32 %v590, %v637
      %v670 = vadd.f32 %v591, %v638
      %v671 = vadd.f32 %v592, %v639
      %v672 = vadd.f32 %v593, %v640
      %v673 = vadd.f32 %v594, %v641
      %v674 = vadd.f32 %v595, %v642
      %v675 = vadd.f32 %v596, %v643
      %v676 = vadd.f32 %v597, %v644
      %v677 = vadd.f32 %v598, %v645
      %v678 = vadd.f32 %v599, %v646
      %v679 = vadd.f32 %v600, %v647
      %v680 = vadd.f32 %v601, %v648
      %v681 = vadd.f32 %v602, %v649
      %v682 = vadd.f32 %v603, %v650
      %v683 = vadd.f32 %v604, %v651
      %v684 = vadd.f32 %v605, %v652
      %v685 = vadd.f32 %v606, %v653
      %v686 = vadd.f32 %v607, %v654
      %v687 = vadd.f32 %v608, %v655
      %v688 = vadd.f32 %v609, %v656
      %s689 = scalar_lea.vmem %s1, 2
      %v690 = vld [vmem:[%s689] sm:$0x1]
      %v692 = vperm.slane %v690, 0
      %v694 = vmul.f32 %v439, %v692
      %v695 = vmul.f32 %v444, %v692
      %v696 = vmul.f32 %v449, %v692
      %v697 = vmul.f32 %v454, %v692
      %v698 = vmul.f32 %v459, %v692
      %v699 = vmul.f32 %v464, %v692
      %v700 = vmul.f32 %v469, %v692
      %v701 = vmul.f32 %v474, %v692
      %v702 = vmul.f32 %v479, %v692
      %v703 = vmul.f32 %v484, %v692
      %v704 = vmul.f32 %v489, %v692
      %v705 = vmul.f32 %v494, %v692
      %v706 = vmul.f32 %v499, %v692
      %v707 = vmul.f32 %v504, %v692
      %v708 = vmul.f32 %v509, %v692
      %v709 = vmul.f32 %v514, %v692
      %v710 = vmul.f32 %v519, %v692
      %v711 = vmul.f32 %v524, %v692
      %v712 = vmul.f32 %v529, %v692
      %v713 = vmul.f32 %v534, %v692
      %v714 = vmul.f32 %v539, %v692
      %v715 = vmul.f32 %v544, %v692
      %v716 = vmul.f32 %v549, %v692
      %v717 = vmul.f32 %v554, %v692
      %v718 = vmul.f32 %v559, %v692
      %v719 = vmul.f32 %v564, %v692
      %v720 = vmul.f32 %v569, %v692
      %v721 = vmul.f32 %v574, %v692
      %v722 = vmul.f32 %v615, %v692
      %v723 = vmul.f32 %v620, %v692
      %v724 = vmul.f32 %v424, %v692
      %v725 = vadd.f32 %v657, %v694
      %v726 = vadd.f32 %v658, %v695
      %v727 = vadd.f32 %v659, %v696
      %v728 = vadd.f32 %v660, %v697
      %v729 = vadd.f32 %v661, %v698
      %v730 = vadd.f32 %v662, %v699
      %v731 = vadd.f32 %v663, %v700
      %v732 = vadd.f32 %v664, %v701
      %v733 = vadd.f32 %v665, %v702
      %v734 = vadd.f32 %v666, %v703
      %v735 = vadd.f32 %v667, %v704
      %v736 = vadd.f32 %v668, %v705
      %v737 = vadd.f32 %v669, %v706
      %v738 = vadd.f32 %v670, %v707
      %v739 = vadd.f32 %v671, %v708
      %v740 = vadd.f32 %v672, %v709
      %v741 = vadd.f32 %v673, %v710
      %v742 = vadd.f32 %v674, %v711
      %v743 = vadd.f32 %v675, %v712
      %v744 = vadd.f32 %v676, %v713
      %v745 = vadd.f32 %v677, %v714
      %v746 = vadd.f32 %v678, %v715
      %v747 = vadd.f32 %v679, %v716
      %v748 = vadd.f32 %v680, %v717
      %v749 = vadd.f32 %v681, %v718
      %v750 = vadd.f32 %v682, %v719
      %v751 = vadd.f32 %v683, %v720
      %v752 = vadd.f32 %v684, %v721
      %v753 = vadd.f32 %v685, %v722
      %v754 = vadd.f32 %v686, %v723
      %v755 = vadd.f32 %v687, %v724
      %v756 = vadd.f32 %v688, %v724
      %v757 = vld [vmem:[%s2] sm:$0x1]
      %v759 = vperm.slane %v757, 0
      %v761 = vadd.f32 %v725, %v759
      %v762 = vadd.f32 %v726, %v759
      %v763 = vadd.f32 %v727, %v759
      %v764 = vadd.f32 %v728, %v759
      %v765 = vadd.f32 %v729, %v759
      %v766 = vadd.f32 %v730, %v759
      %v767 = vadd.f32 %v731, %v759
      %v768 = vadd.f32 %v732, %v759
      %v769 = vadd.f32 %v733, %v759
      %v770 = vadd.f32 %v734, %v759
      %v771 = vadd.f32 %v735, %v759
      %v772 = vadd.f32 %v736, %v759
      %v773 = vadd.f32 %v737, %v759
      %v774 = vadd.f32 %v738, %v759
      %v775 = vadd.f32 %v739, %v759
      %v776 = vadd.f32 %v740, %v759
      %v777 = vadd.f32 %v741, %v759
      %v778 = vadd.f32 %v742, %v759
      %v779 = vadd.f32 %v743, %v759
      %v780 = vadd.f32 %v744, %v759
      %v781 = vadd.f32 %v745, %v759
      %v782 = vadd.f32 %v746, %v759
      %v783 = vadd.f32 %v747, %v759
      %v784 = vadd.f32 %v748, %v759
      %v785 = vadd.f32 %v749, %v759
      %v786 = vadd.f32 %v750, %v759
      %v787 = vadd.f32 %v751, %v759
      %v788 = vadd.f32 %v752, %v759
      %v789 = vadd.f32 %v753, %v759
      %v790 = vadd.f32 %v754, %v759
      %v791 = vadd.f32 %v755, %v759
      %v792 = vadd.f32 %v756, %v759
      %v793 = vmax.f32 %v761, 0.0
      %v794 = vmax.f32 %v762, 0.0
      %v795 = vmax.f32 %v763, 0.0
      %v796 = vmax.f32 %v764, 0.0
      %v797 = vmax.f32 %v765, 0.0
      %v798 = vmax.f32 %v766, 0.0
      %v799 = vmax.f32 %v767, 0.0
      %v800 = vmax.f32 %v768, 0.0
      %v801 = vmax.f32 %v769, 0.0
      %v802 = vmax.f32 %v770, 0.0
      %v803 = vmax.f32 %v771, 0.0
      %v804 = vmax.f32 %v772, 0.0
      %v805 = vmax.f32 %v773, 0.0
      %v806 = vmax.f32 %v774, 0.0
      %v807 = vmax.f32 %v775, 0.0
      %v808 = vmax.f32 %v776, 0.0
      %v809 = vmax.f32 %v777, 0.0
      %v810 = vmax.f32 %v778, 0.0
      %v811 = vmax.f32 %v779, 0.0
      %v812 = vmax.f32 %v780, 0.0
      %v813 = vmax.f32 %v781, 0.0
      %v814 = vmax.f32 %v782, 0.0
      %v815 = vmax.f32 %v783, 0.0
      %v816 = vmax.f32 %v784, 0.0
      %v817 = vmax.f32 %v785, 0.0
      %v818 = vmax.f32 %v786, 0.0
      %v819 = vmax.f32 %v787, 0.0
      %v820 = vmax.f32 %v788, 0.0
      %v821 = vmax.f32 %v789, 0.0
      %v822 = vmax.f32 %v790, 0.0
      %v823 = vmax.f32 %v791, 0.0
      %v824 = vmax.f32 %v792, 0.0
      %v825 = vpack.c.bf16 %v793, %v793
      %v826 = vpack.c.bf16 %v794, %v794
      %v827 = vpack.c.bf16 %v795, %v795
      %v828 = vpack.c.bf16 %v796, %v796
      %v829 = vpack.c.bf16 %v797, %v797
      %v830 = vpack.c.bf16 %v798, %v798
      %v831 = vpack.c.bf16 %v799, %v799
      %v832 = vpack.c.bf16 %v800, %v800
      %v833 = vpack.c.bf16 %v801, %v801
      %v834 = vpack.c.bf16 %v802, %v802
      %v835 = vpack.c.bf16 %v803, %v803
      %v836 = vpack.c.bf16 %v804, %v804
      %v837 = vpack.c.bf16 %v805, %v805
      %v838 = vpack.c.bf16 %v806, %v806
      %v839 = vpack.c.bf16 %v807, %v807
      %v840 = vpack.c.bf16 %v808, %v808
      %v841 = vpack.c.bf16 %v809, %v809
      %v842 = vpack.c.bf16 %v810, %v810
      %v843 = vpack.c.bf16 %v811, %v811
      %v844 = vpack.c.bf16 %v812, %v812
      %v845 = vpack.c.bf16 %v813, %v813
      %v846 = vpack.c.bf16 %v814, %v814
      %v847 = vpack.c.bf16 %v815, %v815
      %v848 = vpack.c.bf16 %v816, %v816
      %v849 = vpack.c.bf16 %v817, %v817
      %v850 = vpack.c.bf16 %v818, %v818
      %v851 = vpack.c.bf16 %v819, %v819
      %v852 = vpack.c.bf16 %v820, %v820
      %v853 = vpack.c.bf16 %v821, %v821
      %v854 = vpack.c.bf16 %v822, %v822
      %v855 = vpack.c.bf16 %v823, %v823
      %v856 = vpack.c.bf16 %v824, %v824
      %v887 = vunpack.c.l.b16 %v825
      %v888 = vunpack.c.l.b16 %v826
      %v889 = vunpack.c.l.b16 %v827
      %v890 = vunpack.c.l.b16 %v828
      %v891 = vunpack.c.l.b16 %v829
      %v892 = vunpack.c.l.b16 %v830
      %v893 = vunpack.c.l.b16 %v831
      %v894 = vunpack.c.l.b16 %v832
      %v895 = vunpack.c.l.b16 %v833
      %v896 = vunpack.c.l.b16 %v834
      %v897 = vunpack.c.l.b16 %v835
      %v898 = vunpack.c.l.b16 %v836
      %v899 = vunpack.c.l.b16 %v837
      %v900 = vunpack.c.l.b16 %v838
      %v901 = vunpack.c.l.b16 %v839
      %v902 = vunpack.c.l.b16 %v840
      %v903 = vunpack.c.l.b16 %v841
      %v904 = vunpack.c.l.b16 %v842
      %v905 = vunpack.c.l.b16 %v843
      %v906 = vunpack.c.l.b16 %v844
      %v907 = vunpack.c.l.b16 %v845
      %v908 = vunpack.c.l.b16 %v846
      %v909 = vunpack.c.l.b16 %v847
      %v910 = vunpack.c.l.b16 %v848
      %v911 = vunpack.c.l.b16 %v849
      %v912 = vunpack.c.l.b16 %v850
      %v913 = vunpack.c.l.b16 %v851
      %v914 = vunpack.c.l.b16 %v852
      %v915 = vunpack.c.l.b16 %v853
      %v916 = vunpack.c.l.b16 %v854
      %v917 = vpack.c.b16 %v888, %v887
      %v918 = vpack.c.b16 %v890, %v889
      %v919 = vpack.c.b16 %v892, %v891
      %v920 = vpack.c.b16 %v894, %v893
      %v921 = vpack.c.b16 %v896, %v895
      %v922 = vpack.c.b16 %v898, %v897
      %v923 = vpack.c.b16 %v900, %v899
      %v924 = vpack.c.b16 %v902, %v901
      %v925 = vpack.c.b16 %v904, %v903
      %v926 = vpack.c.b16 %v906, %v905
      %v927 = vpack.c.b16 %v908, %v907
      %v928 = vpack.c.b16 %v910, %v909
      %v929 = vpack.c.b16 %v912, %v911
      %v930 = vpack.c.b16 %v914, %v913
      %v931 = vpack.c.b16 %v916, %v915
      %v934 = vunpack.c.l.b16 %v855
      %v935 = vunpack.c.l.b16 %v856
      %v936 = vpack.c.b16 %v935, %v934
      %937 = vrot.lane.b32.xlu0 %v917, 64
      %v938 = vpop.permute.xlu0 %937
      %939 = vrot.lane.b32.xlu0 %v918, 64
      %v940 = vpop.permute.xlu0 %939
      %941 = vrot.lane.b32.xlu0 %v919, 64
      %v942 = vpop.permute.xlu0 %941
      %943 = vrot.lane.b32.xlu0 %v920, 64
      %v944 = vpop.permute.xlu0 %943
      %945 = vrot.lane.b32.xlu0 %v921, 64
      %v946 = vpop.permute.xlu0 %945
      %947 = vrot.lane.b32.xlu0 %v922, 64
      %v948 = vpop.permute.xlu0 %947
      %949 = vrot.lane.b32.xlu0 %v923, 64
      %v950 = vpop.permute.xlu0 %949
      %951 = vrot.lane.b32.xlu0 %v924, 64
      %v952 = vpop.permute.xlu0 %951
      %953 = vrot.lane.b32.xlu0 %v925, 64
      %v954 = vpop.permute.xlu0 %953
      %955 = vrot.lane.b32.xlu0 %v926, 64
      %v956 = vpop.permute.xlu0 %955
      %957 = vrot.lane.b32.xlu0 %v927, 64
      %v958 = vpop.permute.xlu0 %957
      %959 = vrot.lane.b32.xlu0 %v928, 64
      %v960 = vpop.permute.xlu0 %959
      %961 = vrot.lane.b32.xlu0 %v929, 64
      %v962 = vpop.permute.xlu0 %961
      %963 = vrot.lane.b32.xlu0 %v930, 64
      %v964 = vpop.permute.xlu0 %963
      %965 = vrot.lane.b32.xlu0 %v931, 64
      %v966 = vpop.permute.xlu0 %965
      %967 = vrot.lane.b32.xlu0 %v936, 64
      %v968 = vpop.permute.xlu0 %967
      %vm969 = vcmask 523264
      %v972 = vsel %vm969, 0, %v938
      %v976 = vsel %vm969, %v917, %v940
      %v980 = vsel %vm969, %v918, %v942
      %v984 = vsel %vm969, %v919, %v944
      %v988 = vsel %vm969, %v920, %v946
      %v992 = vsel %vm969, %v921, %v948
      %v996 = vsel %vm969, %v922, %v950
      %v1000 = vsel %vm969, %v923, %v952
      %v1004 = vsel %vm969, %v924, %v954
      %v1008 = vsel %vm969, %v925, %v956
      %v1012 = vsel %vm969, %v926, %v958
      %v1016 = vsel %vm969, %v927, %v960
      %v1020 = vsel %vm969, %v928, %v962
      %v1024 = vsel %vm969, %v929, %v964
      %v1028 = vsel %vm969, %v930, %v966
      %v1032 = vsel %vm969, %v931, %v968
      %v1034 = vld [vmem:[%s3] sm:$0xf]
      %v1035 = vld [vmem:[%s3 + $0x4] sm:$0xf]
      %v1036 = vld [vmem:[%s3 + $0x8] sm:$0xf]
      %v1037 = vld [vmem:[%s3 + $0xc] sm:$0xf]
      %v1038 = vld [vmem:[%s3 + $0x10] sm:$0xf]
      %v1039 = vld [vmem:[%s3 + $0x14] sm:$0xf]
      %v1040 = vld [vmem:[%s3 + $0x18] sm:$0xf]
      %v1041 = vld [vmem:[%s3 + $0x1c] sm:$0xf]
      %v1042 = vld [vmem:[%s3 + $0x20] sm:$0xf]
      %v1043 = vld [vmem:[%s3 + $0x24] sm:$0xf]
      %v1044 = vld [vmem:[%s3 + $0x28] sm:$0xf]
      %v1045 = vld [vmem:[%s3 + $0x2c] sm:$0xf]
      %v1046 = vld [vmem:[%s3 + $0x30] sm:$0xf]
      %v1047 = vld [vmem:[%s3 + $0x34] sm:$0xf]
      %v1048 = vld [vmem:[%s3 + $0x38] sm:$0xf]
      %v1049 = vld [vmem:[%s3 + $0x3c] sm:$0xf]
      %v1050 = vld [vmem:[%s3 + $0x40] sm:$0xf]
      %v1051 = vld [vmem:[%s3 + $0x44] sm:$0xf]
      %v1052 = vld [vmem:[%s3 + $0x48] sm:$0xf]
      %v1053 = vld [vmem:[%s3 + $0x4c] sm:$0xf]
      %v1054 = vld [vmem:[%s3 + $0x50] sm:$0xf]
      %v1055 = vld [vmem:[%s3 + $0x54] sm:$0xf]
      %v1056 = vld [vmem:[%s3 + $0x58] sm:$0xf]
      %v1057 = vld [vmem:[%s3 + $0x5c] sm:$0xf]
      %v1058 = vld [vmem:[%s4] sm:$0x1]
      %v1060 = vperm.slane %v1058, 0
      %v1086 = vunpack.c.l.b16 %v1034
      %v1087 = vunpack.c.l.b16 %v1035
      %v1088 = vunpack.c.l.b16 %v1036
      %v1089 = vunpack.c.l.b16 %v1037
      %v1090 = vunpack.c.l.b16 %v1038
      %v1091 = vunpack.c.l.b16 %v1039
      %v1092 = vunpack.c.l.b16 %v1040
      %v1093 = vunpack.c.l.b16 %v1041
      %v1094 = vunpack.c.l.b16 %v1042
      %v1095 = vunpack.c.l.b16 %v1043
      %v1096 = vunpack.c.l.b16 %v1044
      %v1097 = vunpack.c.l.b16 %v1045
      %v1098 = vunpack.c.l.b16 %v1046
      %v1099 = vunpack.c.l.b16 %v1047
      %v1100 = vunpack.c.l.b16 %v1048
      %v1101 = vunpack.c.l.b16 %v1049
      %v1102 = vunpack.c.l.b16 %v1050
      %v1103 = vunpack.c.l.b16 %v1051
      %v1104 = vunpack.c.l.b16 %v1052
      %v1105 = vunpack.c.l.b16 %v1053
      %v1106 = vunpack.c.l.b16 %v1054
      %v1107 = vunpack.c.l.b16 %v1055
      %v1108 = vunpack.c.l.b16 %v1056
      %v1109 = vunpack.c.l.b16 %v1057
      %v1110 = vpack.c.b16 %v1087, %v1086
      %v1111 = vpack.c.b16 %v1089, %v1088
      %v1112 = vpack.c.b16 %v1091, %v1090
      %v1113 = vpack.c.b16 %v1093, %v1092
      %v1114 = vpack.c.b16 %v1095, %v1094
      %v1115 = vpack.c.b16 %v1097, %v1096
      %v1116 = vpack.c.b16 %v1099, %v1098
      %v1117 = vpack.c.b16 %v1101, %v1100
      %v1118 = vpack.c.b16 %v1103, %v1102
      %v1119 = vpack.c.b16 %v1105, %v1104
      %v1120 = vpack.c.b16 %v1107, %v1106
      %v1121 = vpack.c.b16 %v1109, %v1108
      %v1134 = vsel %vm969, %v918, 0
      %v1136 = vsel %vm969, %v919, 0
      %v1138 = vsel %vm969, %v920, 0
      %v1140 = vsel %vm969, %v921, 0
      %v1142 = vsel %vm969, %v922, 0
      %v1144 = vsel %vm969, %v923, 0
      %v1146 = vsel %vm969, %v924, 0
      %v1148 = vsel %vm969, %v925, 0
      %v1150 = vsel %vm969, %v926, 0
      %v1152 = vsel %vm969, %v927, 0
      %v1154 = vsel %vm969, %v928, 0
      %v1156 = vsel %vm969, %v929, 0
      %v1158 = vsel %vm969, %v930, 0
      %v1160 = vsel %vm969, %v931, 0
      %v1163 = vsel %vm969, %v936, 0
      %v1165 = vsel %vm969, 0, 0
      %1167 = vmatpush.bf16.msra.mxu0 %v1117
      %1168 = vmatpush.bf16.msra.mxu0 %v1116
      %1169 = vmatpush.bf16.msra.mxu0 %v1115
      %1170 = vmatpush.bf16.msra.mxu0 %v1114
      %1171 = vmatpush.bf16.msra.mxu0 %v1113
      %1172 = vmatpush.bf16.msra.mxu0 %v1112
      %1173 = vmatpush.bf16.msra.mxu0 %v1111
      %1174 = vmatpush.bf16.msra.mxu0 %v1110
      %1175 = vmatmul.bf16.gmra.mxu0 %v972
      %v1176 = vpop.f32.mrf.mxu0
      %v1177 = vadd.f32 %v1060, %v1176
      %v1178 = vpop.f32.mrf.mxu0
      %v1179 = vadd.f32 %v1060, %v1178
      %1180 = vmatmul.bf16.gmra.mxu0 %v976
      %v1181 = vpop.f32.mrf.mxu0
      %v1182 = vadd.f32 %v1060, %v1181
      %v1183 = vpop.f32.mrf.mxu0
      %v1184 = vadd.f32 %v1060, %v1183
      %1185 = vmatmul.bf16.gmra.mxu0 %v980
      %v1186 = vpop.f32.mrf.mxu0
      %v1187 = vadd.f32 %v1060, %v1186
      %v1188 = vpop.f32.mrf.mxu0
      %v1189 = vadd.f32 %v1060, %v1188
      %1190 = vmatmul.bf16.gmra.mxu0 %v984
      %v1191 = vpop.f32.mrf.mxu0
      %v1192 = vadd.f32 %v1060, %v1191
      %v1193 = vpop.f32.mrf.mxu0
      %v1194 = vadd.f32 %v1060, %v1193
      %1195 = vmatmul.bf16.gmra.mxu0 %v988
      %v1196 = vpop.f32.mrf.mxu0
      %v1197 = vadd.f32 %v1060, %v1196
      %v1198 = vpop.f32.mrf.mxu0
      %v1199 = vadd.f32 %v1060, %v1198
      %1200 = vmatmul.bf16.gmra.mxu0 %v992
      %v1201 = vpop.f32.mrf.mxu0
      %v1202 = vadd.f32 %v1060, %v1201
      %v1203 = vpop.f32.mrf.mxu0
      %v1204 = vadd.f32 %v1060, %v1203
      %1205 = vmatmul.bf16.gmra.mxu0 %v996
      %v1206 = vpop.f32.mrf.mxu0
      %v1207 = vadd.f32 %v1060, %v1206
      %v1208 = vpop.f32.mrf.mxu0
      %v1209 = vadd.f32 %v1060, %v1208
      %1210 = vmatmul.bf16.gmra.mxu0 %v1000
      %v1211 = vpop.f32.mrf.mxu0
      %v1212 = vadd.f32 %v1060, %v1211
      %v1213 = vpop.f32.mrf.mxu0
      %v1214 = vadd.f32 %v1060, %v1213
      %1215 = vmatmul.bf16.gmra.mxu0 %v1004
      %v1216 = vpop.f32.mrf.mxu0
      %v1217 = vadd.f32 %v1060, %v1216
      %v1218 = vpop.f32.mrf.mxu0
      %v1219 = vadd.f32 %v1060, %v1218
      %1220 = vmatmul.bf16.gmra.mxu0 %v1008
      %v1221 = vpop.f32.mrf.mxu0
      %v1222 = vadd.f32 %v1060, %v1221
      %v1223 = vpop.f32.mrf.mxu0
      %v1224 = vadd.f32 %v1060, %v1223
      %1225 = vmatmul.bf16.gmra.mxu0 %v1012
      %v1226 = vpop.f32.mrf.mxu0
      %v1227 = vadd.f32 %v1060, %v1226
      %v1228 = vpop.f32.mrf.mxu0
      %v1229 = vadd.f32 %v1060, %v1228
      %1230 = vmatmul.bf16.gmra.mxu0 %v1016
      %v1231 = vpop.f32.mrf.mxu0
      %v1232 = vadd.f32 %v1060, %v1231
      %v1233 = vpop.f32.mrf.mxu0
      %v1234 = vadd.f32 %v1060, %v1233
      %1235 = vmatmul.bf16.gmra.mxu0 %v1020
      %v1236 = vpop.f32.mrf.mxu0
      %v1237 = vadd.f32 %v1060, %v1236
      %v1238 = vpop.f32.mrf.mxu0
      %v1239 = vadd.f32 %v1060, %v1238
      %1240 = vmatmul.bf16.gmra.mxu0 %v1024
      %v1241 = vpop.f32.mrf.mxu0
      %v1242 = vadd.f32 %v1060, %v1241
      %v1243 = vpop.f32.mrf.mxu0
      %v1244 = vadd.f32 %v1060, %v1243
      %1245 = vmatmul.bf16.gmra.mxu0 %v1028
      %v1246 = vpop.f32.mrf.mxu0
      %v1247 = vadd.f32 %v1060, %v1246
      %v1248 = vpop.f32.mrf.mxu0
      %v1249 = vadd.f32 %v1060, %v1248
      %1250 = vmatmul.bf16.gmra.mxu0 %v1032
      %v1251 = vpop.f32.mrf.mxu0
      %v1252 = vadd.f32 %v1060, %v1251
      %v1253 = vpop.f32.mrf.mxu0
      %v1254 = vadd.f32 %v1060, %v1253
      %1255 = vdwg.mxu0
      %1256 = vmatpush.bf16.msra.mxu0 0
      %1257 = vmatpush.bf16.msra.mxu0 0
      %1258 = vmatpush.bf16.msra.mxu0 0
      %1259 = vmatpush.bf16.msra.mxu0 0
      %1260 = vmatpush.bf16.msra.mxu0 %v1121
      %1261 = vmatpush.bf16.msra.mxu0 %v1120
      %1262 = vmatpush.bf16.msra.mxu0 %v1119
      %1263 = vmatpush.bf16.msra.mxu0 %v1118
      %1264 = vmatmul.bf16.gmra.mxu0 %v1134
      %v1265 = vpop.f32.mrf.mxu0
      %v1266 = vadd.f32 %v1177, %v1265
      %v1267 = vpop.f32.mrf.mxu0
      %v1268 = vadd.f32 %v1179, %v1267
      %1269 = vmatmul.bf16.gmra.mxu0 %v1136
      %v1270 = vpop.f32.mrf.mxu0
      %v1271 = vadd.f32 %v1182, %v1270
      %v1272 = vpop.f32.mrf.mxu0
      %v1273 = vadd.f32 %v1184, %v1272
      %1274 = vmatmul.bf16.gmra.mxu0 %v1138
      %v1275 = vpop.f32.mrf.mxu0
      %v1276 = vadd.f32 %v1187, %v1275
      %v1277 = vpop.f32.mrf.mxu0
      %v1278 = vadd.f32 %v1189, %v1277
      %1279 = vmatmul.bf16.gmra.mxu0 %v1140
      %v1280 = vpop.f32.mrf.mxu0
      %v1281 = vadd.f32 %v1192, %v1280
      %v1282 = vpop.f32.mrf.mxu0
      %v1283 = vadd.f32 %v1194, %v1282
      %1284 = vmatmul.bf16.gmra.mxu0 %v1142
      %v1285 = vpop.f32.mrf.mxu0
      %v1286 = vadd.f32 %v1197, %v1285
      %v1287 = vpop.f32.mrf.mxu0
      %v1288 = vadd.f32 %v1199, %v1287
      %1289 = vmatmul.bf16.gmra.mxu0 %v1144
      %v1290 = vpop.f32.mrf.mxu0
      %v1291 = vadd.f32 %v1202, %v1290
      %v1292 = vpop.f32.mrf.mxu0
      %v1293 = vadd.f32 %v1204, %v1292
      %1294 = vmatmul.bf16.gmra.mxu0 %v1146
      %v1295 = vpop.f32.mrf.mxu0
      %v1296 = vadd.f32 %v1207, %v1295
      %v1297 = vpop.f32.mrf.mxu0
      %v1298 = vadd.f32 %v1209, %v1297
      %1299 = vmatmul.bf16.gmra.mxu0 %v1148
      %v1300 = vpop.f32.mrf.mxu0
      %v1301 = vadd.f32 %v1212, %v1300
      %v1302 = vpop.f32.mrf.mxu0
      %v1303 = vadd.f32 %v1214, %v1302
      %1304 = vmatmul.bf16.gmra.mxu0 %v1150
      %v1305 = vpop.f32.mrf.mxu0
      %v1306 = vadd.f32 %v1217, %v1305
      %v1307 = vpop.f32.mrf.mxu0
      %v1308 = vadd.f32 %v1219, %v1307
      %1309 = vmatmul.bf16.gmra.mxu0 %v1152
      %v1310 = vpop.f32.mrf.mxu0
      %v1311 = vadd.f32 %v1222, %v1310
      %v1312 = vpop.f32.mrf.mxu0
      %v1313 = vadd.f32 %v1224, %v1312
      %1314 = vmatmul.bf16.gmra.mxu0 %v1154
      %v1315 = vpop.f32.mrf.mxu0
      %v1316 = vadd.f32 %v1227, %v1315
      %v1317 = vpop.f32.mrf.mxu0
      %v1318 = vadd.f32 %v1229, %v1317
      %1319 = vmatmul.bf16.gmra.mxu0 %v1156
      %v1320 = vpop.f32.mrf.mxu0
      %v1321 = vadd.f32 %v1232, %v1320
      %v1322 = vpop.f32.mrf.mxu0
      %v1323 = vadd.f32 %v1234, %v1322
      %1324 = vmatmul.bf16.gmra.mxu0 %v1158
      %v1325 = vpop.f32.mrf.mxu0
      %v1326 = vadd.f32 %v1237, %v1325
      %v1327 = vpop.f32.mrf.mxu0
      %v1328 = vadd.f32 %v1239, %v1327
      %1329 = vmatmul.bf16.gmra.mxu0 %v1160
      %v1330 = vpop.f32.mrf.mxu0
      %v1331 = vadd.f32 %v1242, %v1330
      %v1332 = vpop.f32.mrf.mxu0
      %v1333 = vadd.f32 %v1244, %v1332
      %1334 = vmatmul.bf16.gmra.mxu0 %v1163
      %v1335 = vpop.f32.mrf.mxu0
      %v1336 = vadd.f32 %v1247, %v1335
      %v1337 = vpop.f32.mrf.mxu0
      %v1338 = vadd.f32 %v1249, %v1337
      %1339 = vmatmul.bf16.gmra.mxu0 %v1165
      %v1340 = vpop.f32.mrf.mxu0
      %v1341 = vadd.f32 %v1252, %v1340
      %v1342 = vpop.f32.mrf.mxu0
      %v1343 = vadd.f32 %v1254, %v1342
      %1344 = vdwg.mxu0
      %v1345 = vmax.f32 %v1266, 0.0
      %v1346 = vmax.f32 %v1268, 0.0
      %v1347 = vmax.f32 %v1271, 0.0
      %v1348 = vmax.f32 %v1273, 0.0
      %v1349 = vmax.f32 %v1276, 0.0
      %v1350 = vmax.f32 %v1278, 0.0
      %v1351 = vmax.f32 %v1281, 0.0
      %v1352 = vmax.f32 %v1283, 0.0
      %v1353 = vmax.f32 %v1286, 0.0
      %v1354 = vmax.f32 %v1288, 0.0
      %v1355 = vmax.f32 %v1291, 0.0
      %v1356 = vmax.f32 %v1293, 0.0
      %v1357 = vmax.f32 %v1296, 0.0
      %v1358 = vmax.f32 %v1298, 0.0
      %v1359 = vmax.f32 %v1301, 0.0
      %v1360 = vmax.f32 %v1303, 0.0
      %v1361 = vmax.f32 %v1306, 0.0
      %v1362 = vmax.f32 %v1308, 0.0
      %v1363 = vmax.f32 %v1311, 0.0
      %v1364 = vmax.f32 %v1313, 0.0
      %v1365 = vmax.f32 %v1316, 0.0
      %v1366 = vmax.f32 %v1318, 0.0
      %v1367 = vmax.f32 %v1321, 0.0
      %v1368 = vmax.f32 %v1323, 0.0
      %v1369 = vmax.f32 %v1326, 0.0
      %v1370 = vmax.f32 %v1328, 0.0
      %v1371 = vmax.f32 %v1331, 0.0
      %v1372 = vmax.f32 %v1333, 0.0
      %v1373 = vmax.f32 %v1336, 0.0
      %v1374 = vmax.f32 %v1338, 0.0
      %v1375 = vmax.f32 %v1341, 0.0
      %v1376 = vmax.f32 %v1343, 0.0
      %v1377 = vpack.c.bf16 %v1345, %v1345
      %v1378 = vpack.c.bf16 %v1346, %v1346
      %v1379 = vpack.c.bf16 %v1347, %v1347
      %v1380 = vpack.c.bf16 %v1348, %v1348
      %v1381 = vpack.c.bf16 %v1349, %v1349
      %v1382 = vpack.c.bf16 %v1350, %v1350
      %v1383 = vpack.c.bf16 %v1351, %v1351
      %v1384 = vpack.c.bf16 %v1352, %v1352
      %v1385 = vpack.c.bf16 %v1353, %v1353
      %v1386 = vpack.c.bf16 %v1354, %v1354
      %v1387 = vpack.c.bf16 %v1355, %v1355
      %v1388 = vpack.c.bf16 %v1356, %v1356
      %v1389 = vpack.c.bf16 %v1357, %v1357
      %v1390 = vpack.c.bf16 %v1358, %v1358
      %v1391 = vpack.c.bf16 %v1359, %v1359
      %v1392 = vpack.c.bf16 %v1360, %v1360
      %v1393 = vpack.c.bf16 %v1361, %v1361
      %v1394 = vpack.c.bf16 %v1362, %v1362
      %v1395 = vpack.c.bf16 %v1363, %v1363
      %v1396 = vpack.c.bf16 %v1364, %v1364
      %v1397 = vpack.c.bf16 %v1365, %v1365
      %v1398 = vpack.c.bf16 %v1366, %v1366
      %v1399 = vpack.c.bf16 %v1367, %v1367
      %v1400 = vpack.c.bf16 %v1368, %v1368
      %v1401 = vpack.c.bf16 %v1369, %v1369
      %v1402 = vpack.c.bf16 %v1370, %v1370
      %v1403 = vpack.c.bf16 %v1371, %v1371
      %v1404 = vpack.c.bf16 %v1372, %v1372
      %v1405 = vpack.c.bf16 %v1373, %v1373
      %v1406 = vpack.c.bf16 %v1374, %v1374
      %v1407 = vpack.c.bf16 %v1375, %v1375
      %v1408 = vpack.c.bf16 %v1376, %v1376
      %v1439 = vunpack.c.l.b16 %v1377
      %v1440 = vunpack.c.l.b16 %v1378
      %v1441 = vunpack.c.l.b16 %v1379
      %v1442 = vunpack.c.l.b16 %v1380
      %v1443 = vunpack.c.l.b16 %v1381
      %v1444 = vunpack.c.l.b16 %v1382
      %v1445 = vunpack.c.l.b16 %v1383
      %v1446 = vunpack.c.l.b16 %v1384
      %v1447 = vunpack.c.l.b16 %v1385
      %v1448 = vunpack.c.l.b16 %v1386
      %v1449 = vunpack.c.l.b16 %v1387
      %v1450 = vunpack.c.l.b16 %v1388
      %v1451 = vunpack.c.l.b16 %v1389
      %v1452 = vunpack.c.l.b16 %v1390
      %v1453 = vunpack.c.l.b16 %v1391
      %v1454 = vunpack.c.l.b16 %v1392
      %v1455 = vunpack.c.l.b16 %v1393
      %v1456 = vunpack.c.l.b16 %v1394
      %v1457 = vunpack.c.l.b16 %v1395
      %v1458 = vunpack.c.l.b16 %v1396
      %v1459 = vunpack.c.l.b16 %v1397
      %v1460 = vunpack.c.l.b16 %v1398
      %v1461 = vunpack.c.l.b16 %v1399
      %v1462 = vunpack.c.l.b16 %v1400
      %v1463 = vunpack.c.l.b16 %v1401
      %v1464 = vunpack.c.l.b16 %v1402
      %v1465 = vunpack.c.l.b16 %v1403
      %v1466 = vunpack.c.l.b16 %v1404
      %v1467 = vunpack.c.l.b16 %v1405
      %v1468 = vunpack.c.l.b16 %v1406
      %v1469 = vpack.c.b16 %v1440, %v1439
      %v1470 = vpack.c.b16 %v1442, %v1441
      %v1471 = vpack.c.b16 %v1444, %v1443
      %v1472 = vpack.c.b16 %v1446, %v1445
      %v1473 = vpack.c.b16 %v1448, %v1447
      %v1474 = vpack.c.b16 %v1450, %v1449
      %v1475 = vpack.c.b16 %v1452, %v1451
      %v1476 = vpack.c.b16 %v1454, %v1453
      %v1477 = vpack.c.b16 %v1456, %v1455
      %v1478 = vpack.c.b16 %v1458, %v1457
      %v1479 = vpack.c.b16 %v1460, %v1459
      %v1480 = vpack.c.b16 %v1462, %v1461
      %v1481 = vpack.c.b16 %v1464, %v1463
      %v1482 = vpack.c.b16 %v1466, %v1465
      %v1483 = vpack.c.b16 %v1468, %v1467
      %v1486 = vunpack.c.l.b16 %v1407
      %v1487 = vunpack.c.l.b16 %v1408
      %v1488 = vpack.c.b16 %v1487, %v1486
      %1489 = vrot.lane.b32.xlu0 %v1469, 64
      %v1490 = vpop.permute.xlu0 %1489
      %1491 = vrot.lane.b32.xlu0 %v1470, 64
      %v1492 = vpop.permute.xlu0 %1491
      %1493 = vrot.lane.b32.xlu0 %v1471, 64
      %v1494 = vpop.permute.xlu0 %1493
      %1495 = vrot.lane.b32.xlu0 %v1472, 64
      %v1496 = vpop.permute.xlu0 %1495
      %1497 = vrot.lane.b32.xlu0 %v1473, 64
      %v1498 = vpop.permute.xlu0 %1497
      %1499 = vrot.lane.b32.xlu0 %v1474, 64
      %v1500 = vpop.permute.xlu0 %1499
      %1501 = vrot.lane.b32.xlu0 %v1475, 64
      %v1502 = vpop.permute.xlu0 %1501
      %1503 = vrot.lane.b32.xlu0 %v1476, 64
      %v1504 = vpop.permute.xlu0 %1503
      %1505 = vrot.lane.b32.xlu0 %v1477, 64
      %v1506 = vpop.permute.xlu0 %1505
      %1507 = vrot.lane.b32.xlu0 %v1478, 64
      %v1508 = vpop.permute.xlu0 %1507
      %1509 = vrot.lane.b32.xlu0 %v1479, 64
      %v1510 = vpop.permute.xlu0 %1509
      %1511 = vrot.lane.b32.xlu0 %v1480, 64
      %v1512 = vpop.permute.xlu0 %1511
      %1513 = vrot.lane.b32.xlu0 %v1481, 64
      %v1514 = vpop.permute.xlu0 %1513
      %1515 = vrot.lane.b32.xlu0 %v1482, 64
      %v1516 = vpop.permute.xlu0 %1515
      %1517 = vrot.lane.b32.xlu0 %v1483, 64
      %v1518 = vpop.permute.xlu0 %1517
      %1519 = vrot.lane.b32.xlu0 %v1488, 64
      %v1520 = vpop.permute.xlu0 %1519
      %v1522 = vsel %vm969, 0, %v1490
      %v1526 = vsel %vm969, %v1469, %v1492
      %v1530 = vsel %vm969, %v1470, %v1494
      %v1534 = vsel %vm969, %v1471, %v1496
      %v1538 = vsel %vm969, %v1472, %v1498
      %v1542 = vsel %vm969, %v1473, %v1500
      %v1546 = vsel %vm969, %v1474, %v1502
      %v1550 = vsel %vm969, %v1475, %v1504
      %v1554 = vsel %vm969, %v1476, %v1506
      %v1558 = vsel %vm969, %v1477, %v1508
      %v1562 = vsel %vm969, %v1478, %v1510
      %v1566 = vsel %vm969, %v1479, %v1512
      %v1570 = vsel %vm969, %v1480, %v1514
      %v1574 = vsel %vm969, %v1481, %v1516
      %v1578 = vsel %vm969, %v1482, %v1518
      %v1582 = vsel %vm969, %v1483, %v1520
      %v1584 = vld [vmem:[%s5] sm:$0xf]
      %v1585 = vld [vmem:[%s5 + $0x4] sm:$0xf]
      %v1586 = vld [vmem:[%s5 + $0x8] sm:$0xf]
      %v1587 = vld [vmem:[%s5 + $0xc] sm:$0xf]
      %v1588 = vld [vmem:[%s5 + $0x10] sm:$0xf]
      %v1589 = vld [vmem:[%s5 + $0x14] sm:$0xf]
      %v1590 = vld [vmem:[%s5 + $0x18] sm:$0xf]
      %v1591 = vld [vmem:[%s5 + $0x1c] sm:$0xf]
      %v1592 = vld [vmem:[%s5 + $0x20] sm:$0xf]
      %v1593 = vld [vmem:[%s5 + $0x24] sm:$0xf]
      %v1594 = vld [vmem:[%s5 + $0x28] sm:$0xf]
      %v1595 = vld [vmem:[%s5 + $0x2c] sm:$0xf]
      %v1596 = vld [vmem:[%s5 + $0x30] sm:$0xf]
      %v1597 = vld [vmem:[%s5 + $0x34] sm:$0xf]
      %v1598 = vld [vmem:[%s5 + $0x38] sm:$0xf]
      %v1599 = vld [vmem:[%s5 + $0x3c] sm:$0xf]
      %v1600 = vld [vmem:[%s5 + $0x40] sm:$0xf]
      %v1601 = vld [vmem:[%s5 + $0x44] sm:$0xf]
      %v1602 = vld [vmem:[%s5 + $0x48] sm:$0xf]
      %v1603 = vld [vmem:[%s5 + $0x4c] sm:$0xf]
      %v1604 = vld [vmem:[%s5 + $0x50] sm:$0xf]
      %v1605 = vld [vmem:[%s5 + $0x54] sm:$0xf]
      %v1606 = vld [vmem:[%s5 + $0x58] sm:$0xf]
      %v1607 = vld [vmem:[%s5 + $0x5c] sm:$0xf]
      %v1608 = vld [vmem:[%s6] sm:$0x1]
      %v1610 = vperm.slane %v1608, 0
      %v1636 = vunpack.c.l.b16 %v1584
      %v1637 = vunpack.c.l.b16 %v1585
      %v1638 = vunpack.c.l.b16 %v1586
      %v1639 = vunpack.c.l.b16 %v1587
      %v1640 = vunpack.c.l.b16 %v1588
      %v1641 = vunpack.c.l.b16 %v1589
      %v1642 = vunpack.c.l.b16 %v1590
      %v1643 = vunpack.c.l.b16 %v1591
      %v1644 = vunpack.c.l.b16 %v1592
      %v1645 = vunpack.c.l.b16 %v1593
      %v1646 = vunpack.c.l.b16 %v1594
      %v1647 = vunpack.c.l.b16 %v1595
      %v1648 = vunpack.c.l.b16 %v1596
      %v1649 = vunpack.c.l.b16 %v1597
      %v1650 = vunpack.c.l.b16 %v1598
      %v1651 = vunpack.c.l.b16 %v1599
      %v1652 = vunpack.c.l.b16 %v1600
      %v1653 = vunpack.c.l.b16 %v1601
      %v1654 = vunpack.c.l.b16 %v1602
      %v1655 = vunpack.c.l.b16 %v1603
      %v1656 = vunpack.c.l.b16 %v1604
      %v1657 = vunpack.c.l.b16 %v1605
      %v1658 = vunpack.c.l.b16 %v1606
      %v1659 = vunpack.c.l.b16 %v1607
      %v1660 = vpack.c.b16 %v1637, %v1636
      %v1661 = vpack.c.b16 %v1639, %v1638
      %v1662 = vpack.c.b16 %v1641, %v1640
      %v1663 = vpack.c.b16 %v1643, %v1642
      %v1664 = vpack.c.b16 %v1645, %v1644
      %v1665 = vpack.c.b16 %v1647, %v1646
      %v1666 = vpack.c.b16 %v1649, %v1648
      %v1667 = vpack.c.b16 %v1651, %v1650
      %v1668 = vpack.c.b16 %v1653, %v1652
      %v1669 = vpack.c.b16 %v1655, %v1654
      %v1670 = vpack.c.b16 %v1657, %v1656
      %v1671 = vpack.c.b16 %v1659, %v1658
      %v1684 = vsel %vm969, %v1470, 0
      %v1686 = vsel %vm969, %v1471, 0
      %v1688 = vsel %vm969, %v1472, 0
      %v1690 = vsel %vm969, %v1473, 0
      %v1692 = vsel %vm969, %v1474, 0
      %v1694 = vsel %vm969, %v1475, 0
      %v1696 = vsel %vm969, %v1476, 0
      %v1698 = vsel %vm969, %v1477, 0
      %v1700 = vsel %vm969, %v1478, 0
      %v1702 = vsel %vm969, %v1479, 0
      %v1704 = vsel %vm969, %v1480, 0
      %v1706 = vsel %vm969, %v1481, 0
      %v1708 = vsel %vm969, %v1482, 0
      %v1710 = vsel %vm969, %v1483, 0
      %v1713 = vsel %vm969, %v1488, 0
      %1715 = vmatpush.bf16.msra.mxu0 %v1667
      %1716 = vmatpush.bf16.msra.mxu0 %v1666
      %1717 = vmatpush.bf16.msra.mxu0 %v1665
      %1718 = vmatpush.bf16.msra.mxu0 %v1664
      %1719 = vmatpush.bf16.msra.mxu0 %v1663
      %1720 = vmatpush.bf16.msra.mxu0 %v1662
      %1721 = vmatpush.bf16.msra.mxu0 %v1661
      %1722 = vmatpush.bf16.msra.mxu0 %v1660
      %1723 = vmatmul.bf16.gmra.mxu0 %v1522
      %v1724 = vpop.f32.mrf.mxu0
      %v1725 = vadd.f32 %v1610, %v1724
      %v1726 = vpop.f32.mrf.mxu0
      %v1727 = vadd.f32 %v1610, %v1726
      %1728 = vmatmul.bf16.gmra.mxu0 %v1526
      %v1729 = vpop.f32.mrf.mxu0
      %v1730 = vadd.f32 %v1610, %v1729
      %v1731 = vpop.f32.mrf.mxu0
      %v1732 = vadd.f32 %v1610, %v1731
      %1733 = vmatmul.bf16.gmra.mxu0 %v1530
      %v1734 = vpop.f32.mrf.mxu0
      %v1735 = vadd.f32 %v1610, %v1734
      %v1736 = vpop.f32.mrf.mxu0
      %v1737 = vadd.f32 %v1610, %v1736
      %1738 = vmatmul.bf16.gmra.mxu0 %v1534
      %v1739 = vpop.f32.mrf.mxu0
      %v1740 = vadd.f32 %v1610, %v1739
      %v1741 = vpop.f32.mrf.mxu0
      %v1742 = vadd.f32 %v1610, %v1741
      %1743 = vmatmul.bf16.gmra.mxu0 %v1538
      %v1744 = vpop.f32.mrf.mxu0
      %v1745 = vadd.f32 %v1610, %v1744
      %v1746 = vpop.f32.mrf.mxu0
      %v1747 = vadd.f32 %v1610, %v1746
      %1748 = vmatmul.bf16.gmra.mxu0 %v1542
      %v1749 = vpop.f32.mrf.mxu0
      %v1750 = vadd.f32 %v1610, %v1749
      %v1751 = vpop.f32.mrf.mxu0
      %v1752 = vadd.f32 %v1610, %v1751
      %1753 = vmatmul.bf16.gmra.mxu0 %v1546
      %v1754 = vpop.f32.mrf.mxu0
      %v1755 = vadd.f32 %v1610, %v1754
      %v1756 = vpop.f32.mrf.mxu0
      %v1757 = vadd.f32 %v1610, %v1756
      %1758 = vmatmul.bf16.gmra.mxu0 %v1550
      %v1759 = vpop.f32.mrf.mxu0
      %v1760 = vadd.f32 %v1610, %v1759
      %v1761 = vpop.f32.mrf.mxu0
      %v1762 = vadd.f32 %v1610, %v1761
      %1763 = vmatmul.bf16.gmra.mxu0 %v1554
      %v1764 = vpop.f32.mrf.mxu0
      %v1765 = vadd.f32 %v1610, %v1764
      %v1766 = vpop.f32.mrf.mxu0
      %v1767 = vadd.f32 %v1610, %v1766
      %1768 = vmatmul.bf16.gmra.mxu0 %v1558
      %v1769 = vpop.f32.mrf.mxu0
      %v1770 = vadd.f32 %v1610, %v1769
      %v1771 = vpop.f32.mrf.mxu0
      %v1772 = vadd.f32 %v1610, %v1771
      %1773 = vmatmul.bf16.gmra.mxu0 %v1562
      %v1774 = vpop.f32.mrf.mxu0
      %v1775 = vadd.f32 %v1610, %v1774
      %v1776 = vpop.f32.mrf.mxu0
      %v1777 = vadd.f32 %v1610, %v1776
      %1778 = vmatmul.bf16.gmra.mxu0 %v1566
      %v1779 = vpop.f32.mrf.mxu0
      %v1780 = vadd.f32 %v1610, %v1779
      %v1781 = vpop.f32.mrf.mxu0
      %v1782 = vadd.f32 %v1610, %v1781
      %1783 = vmatmul.bf16.gmra.mxu0 %v1570
      %v1784 = vpop.f32.mrf.mxu0
      %v1785 = vadd.f32 %v1610, %v1784
      %v1786 = vpop.f32.mrf.mxu0
      %v1787 = vadd.f32 %v1610, %v1786
      %1788 = vmatmul.bf16.gmra.mxu0 %v1574
      %v1789 = vpop.f32.mrf.mxu0
      %v1790 = vadd.f32 %v1610, %v1789
      %v1791 = vpop.f32.mrf.mxu0
      %v1792 = vadd.f32 %v1610, %v1791
      %1793 = vmatmul.bf16.gmra.mxu0 %v1578
      %v1794 = vpop.f32.mrf.mxu0
      %v1795 = vadd.f32 %v1610, %v1794
      %v1796 = vpop.f32.mrf.mxu0
      %v1797 = vadd.f32 %v1610, %v1796
      %1798 = vmatmul.bf16.gmra.mxu0 %v1582
      %v1799 = vpop.f32.mrf.mxu0
      %v1800 = vadd.f32 %v1610, %v1799
      %v1801 = vpop.f32.mrf.mxu0
      %v1802 = vadd.f32 %v1610, %v1801
      %1803 = vdwg.mxu0
      %1804 = vmatpush.bf16.msra.mxu0 0
      %1805 = vmatpush.bf16.msra.mxu0 0
      %1806 = vmatpush.bf16.msra.mxu0 0
      %1807 = vmatpush.bf16.msra.mxu0 0
      %1808 = vmatpush.bf16.msra.mxu0 %v1671
      %1809 = vmatpush.bf16.msra.mxu0 %v1670
      %1810 = vmatpush.bf16.msra.mxu0 %v1669
      %1811 = vmatpush.bf16.msra.mxu0 %v1668
      %1812 = vmatmul.bf16.gmra.mxu0 %v1684
      %v1813 = vpop.f32.mrf.mxu0
      %v1814 = vadd.f32 %v1725, %v1813
      %v1815 = vpop.f32.mrf.mxu0
      %v1816 = vadd.f32 %v1727, %v1815
      %1817 = vmatmul.bf16.gmra.mxu0 %v1686
      %v1818 = vpop.f32.mrf.mxu0
      %v1819 = vadd.f32 %v1730, %v1818
      %v1820 = vpop.f32.mrf.mxu0
      %v1821 = vadd.f32 %v1732, %v1820
      %1822 = vmatmul.bf16.gmra.mxu0 %v1688
      %v1823 = vpop.f32.mrf.mxu0
      %v1824 = vadd.f32 %v1735, %v1823
      %v1825 = vpop.f32.mrf.mxu0
      %v1826 = vadd.f32 %v1737, %v1825
      %1827 = vmatmul.bf16.gmra.mxu0 %v1690
      %v1828 = vpop.f32.mrf.mxu0
      %v1829 = vadd.f32 %v1740, %v1828
      %v1830 = vpop.f32.mrf.mxu0
      %v1831 = vadd.f32 %v1742, %v1830
      %1832 = vmatmul.bf16.gmra.mxu0 %v1692
      %v1833 = vpop.f32.mrf.mxu0
      %v1834 = vadd.f32 %v1745, %v1833
      %v1835 = vpop.f32.mrf.mxu0
      %v1836 = vadd.f32 %v1747, %v1835
      %1837 = vmatmul.bf16.gmra.mxu0 %v1694
      %v1838 = vpop.f32.mrf.mxu0
      %v1839 = vadd.f32 %v1750, %v1838
      %v1840 = vpop.f32.mrf.mxu0
      %v1841 = vadd.f32 %v1752, %v1840
      %1842 = vmatmul.bf16.gmra.mxu0 %v1696
      %v1843 = vpop.f32.mrf.mxu0
      %v1844 = vadd.f32 %v1755, %v1843
      %v1845 = vpop.f32.mrf.mxu0
      %v1846 = vadd.f32 %v1757, %v1845
      %1847 = vmatmul.bf16.gmra.mxu0 %v1698
      %v1848 = vpop.f32.mrf.mxu0
      %v1849 = vadd.f32 %v1760, %v1848
      %v1850 = vpop.f32.mrf.mxu0
      %v1851 = vadd.f32 %v1762, %v1850
      %1852 = vmatmul.bf16.gmra.mxu0 %v1700
      %v1853 = vpop.f32.mrf.mxu0
      %v1854 = vadd.f32 %v1765, %v1853
      %v1855 = vpop.f32.mrf.mxu0
      %v1856 = vadd.f32 %v1767, %v1855
      %1857 = vmatmul.bf16.gmra.mxu0 %v1702
      %v1858 = vpop.f32.mrf.mxu0
      %v1859 = vadd.f32 %v1770, %v1858
      %v1860 = vpop.f32.mrf.mxu0
      %v1861 = vadd.f32 %v1772, %v1860
      %1862 = vmatmul.bf16.gmra.mxu0 %v1704
      %v1863 = vpop.f32.mrf.mxu0
      %v1864 = vadd.f32 %v1775, %v1863
      %v1865 = vpop.f32.mrf.mxu0
      %v1866 = vadd.f32 %v1777, %v1865
      %1867 = vmatmul.bf16.gmra.mxu0 %v1706
      %v1868 = vpop.f32.mrf.mxu0
      %v1869 = vadd.f32 %v1780, %v1868
      %v1870 = vpop.f32.mrf.mxu0
      %v1871 = vadd.f32 %v1782, %v1870
      %1872 = vmatmul.bf16.gmra.mxu0 %v1708
      %v1873 = vpop.f32.mrf.mxu0
      %v1874 = vadd.f32 %v1785, %v1873
      %v1875 = vpop.f32.mrf.mxu0
      %v1876 = vadd.f32 %v1787, %v1875
      %1877 = vmatmul.bf16.gmra.mxu0 %v1710
      %v1878 = vpop.f32.mrf.mxu0
      %v1879 = vadd.f32 %v1790, %v1878
      %v1880 = vpop.f32.mrf.mxu0
      %v1881 = vadd.f32 %v1792, %v1880
      %1882 = vmatmul.bf16.gmra.mxu0 %v1713
      %v1883 = vpop.f32.mrf.mxu0
      %v1884 = vadd.f32 %v1795, %v1883
      %v1885 = vpop.f32.mrf.mxu0
      %v1886 = vadd.f32 %v1797, %v1885
      %1887 = vmatmul.bf16.gmra.mxu0 %v1165
      %v1888 = vpop.f32.mrf.mxu0
      %v1889 = vadd.f32 %v1800, %v1888
      %v1890 = vpop.f32.mrf.mxu0
      %v1891 = vadd.f32 %v1802, %v1890
      %1892 = vdwg.mxu0
      %v1893 = vmax.f32 %v1814, 0.0
      %v1894 = vmax.f32 %v1816, 0.0
      %v1895 = vmax.f32 %v1819, 0.0
      %v1896 = vmax.f32 %v1821, 0.0
      %v1897 = vmax.f32 %v1824, 0.0
      %v1898 = vmax.f32 %v1826, 0.0
      %v1899 = vmax.f32 %v1829, 0.0
      %v1900 = vmax.f32 %v1831, 0.0
      %v1901 = vmax.f32 %v1834, 0.0
      %v1902 = vmax.f32 %v1836, 0.0
      %v1903 = vmax.f32 %v1839, 0.0
      %v1904 = vmax.f32 %v1841, 0.0
      %v1905 = vmax.f32 %v1844, 0.0
      %v1906 = vmax.f32 %v1846, 0.0
      %v1907 = vmax.f32 %v1849, 0.0
      %v1908 = vmax.f32 %v1851, 0.0
      %v1909 = vmax.f32 %v1854, 0.0
      %v1910 = vmax.f32 %v1856, 0.0
      %v1911 = vmax.f32 %v1859, 0.0
      %v1912 = vmax.f32 %v1861, 0.0
      %v1913 = vmax.f32 %v1864, 0.0
      %v1914 = vmax.f32 %v1866, 0.0
      %v1915 = vmax.f32 %v1869, 0.0
      %v1916 = vmax.f32 %v1871, 0.0
      %v1917 = vmax.f32 %v1874, 0.0
      %v1918 = vmax.f32 %v1876, 0.0
      %v1919 = vmax.f32 %v1879, 0.0
      %v1920 = vmax.f32 %v1881, 0.0
      %v1921 = vmax.f32 %v1884, 0.0
      %v1922 = vmax.f32 %v1886, 0.0
      %v1923 = vmax.f32 %v1889, 0.0
      %v1924 = vmax.f32 %v1891, 0.0
      %v1925 = vpack.c.bf16 %v1893, %v1893
      %v1926 = vpack.c.bf16 %v1894, %v1894
      %v1927 = vpack.c.bf16 %v1895, %v1895
      %v1928 = vpack.c.bf16 %v1896, %v1896
      %v1929 = vpack.c.bf16 %v1897, %v1897
      %v1930 = vpack.c.bf16 %v1898, %v1898
      %v1931 = vpack.c.bf16 %v1899, %v1899
      %v1932 = vpack.c.bf16 %v1900, %v1900
      %v1933 = vpack.c.bf16 %v1901, %v1901
      %v1934 = vpack.c.bf16 %v1902, %v1902
      %v1935 = vpack.c.bf16 %v1903, %v1903
      %v1936 = vpack.c.bf16 %v1904, %v1904
      %v1937 = vpack.c.bf16 %v1905, %v1905
      %v1938 = vpack.c.bf16 %v1906, %v1906
      %v1939 = vpack.c.bf16 %v1907, %v1907
      %v1940 = vpack.c.bf16 %v1908, %v1908
      %v1941 = vpack.c.bf16 %v1909, %v1909
      %v1942 = vpack.c.bf16 %v1910, %v1910
      %v1943 = vpack.c.bf16 %v1911, %v1911
      %v1944 = vpack.c.bf16 %v1912, %v1912
      %v1945 = vpack.c.bf16 %v1913, %v1913
      %v1946 = vpack.c.bf16 %v1914, %v1914
      %v1947 = vpack.c.bf16 %v1915, %v1915
      %v1948 = vpack.c.bf16 %v1916, %v1916
      %v1949 = vpack.c.bf16 %v1917, %v1917
      %v1950 = vpack.c.bf16 %v1918, %v1918
      %v1951 = vpack.c.bf16 %v1919, %v1919
      %v1952 = vpack.c.bf16 %v1920, %v1920
      %v1953 = vpack.c.bf16 %v1921, %v1921
      %v1954 = vpack.c.bf16 %v1922, %v1922
      %v1955 = vpack.c.bf16 %v1923, %v1923
      %v1956 = vpack.c.bf16 %v1924, %v1924
      %v1987 = vunpack.c.l.b16 %v1925
      %v1988 = vunpack.c.l.b16 %v1926
      %v1989 = vunpack.c.l.b16 %v1927
      %v1990 = vunpack.c.l.b16 %v1928
      %v1991 = vunpack.c.l.b16 %v1929
      %v1992 = vunpack.c.l.b16 %v1930
      %v1993 = vunpack.c.l.b16 %v1931
      %v1994 = vunpack.c.l.b16 %v1932
      %v1995 = vunpack.c.l.b16 %v1933
      %v1996 = vunpack.c.l.b16 %v1934
      %v1997 = vunpack.c.l.b16 %v1935
      %v1998 = vunpack.c.l.b16 %v1936
      %v1999 = vunpack.c.l.b16 %v1937
      %v2000 = vunpack.c.l.b16 %v1938
      %v2001 = vunpack.c.l.b16 %v1939
      %v2002 = vunpack.c.l.b16 %v1940
      %v2003 = vunpack.c.l.b16 %v1941
      %v2004 = vunpack.c.l.b16 %v1942
      %v2005 = vunpack.c.l.b16 %v1943
      %v2006 = vunpack.c.l.b16 %v1944
      %v2007 = vunpack.c.l.b16 %v1945
      %v2008 = vunpack.c.l.b16 %v1946
      %v2009 = vunpack.c.l.b16 %v1947
      %v2010 = vunpack.c.l.b16 %v1948
      %v2011 = vunpack.c.l.b16 %v1949
      %v2012 = vunpack.c.l.b16 %v1950
      %v2013 = vunpack.c.l.b16 %v1951
      %v2014 = vunpack.c.l.b16 %v1952
      %v2015 = vunpack.c.l.b16 %v1953
      %v2016 = vunpack.c.l.b16 %v1954
      %v2017 = vpack.c.b16 %v1988, %v1987
      %v2018 = vpack.c.b16 %v1990, %v1989
      %v2019 = vpack.c.b16 %v1992, %v1991
      %v2020 = vpack.c.b16 %v1994, %v1993
      %v2021 = vpack.c.b16 %v1996, %v1995
      %v2022 = vpack.c.b16 %v1998, %v1997
      %v2023 = vpack.c.b16 %v2000, %v1999
      %v2024 = vpack.c.b16 %v2002, %v2001
      %v2025 = vpack.c.b16 %v2004, %v2003
      %v2026 = vpack.c.b16 %v2006, %v2005
      %v2027 = vpack.c.b16 %v2008, %v2007
      %v2028 = vpack.c.b16 %v2010, %v2009
      %v2029 = vpack.c.b16 %v2012, %v2011
      %v2030 = vpack.c.b16 %v2014, %v2013
      %v2031 = vpack.c.b16 %v2016, %v2015
      %v2034 = vunpack.c.l.b16 %v1955
      %v2035 = vunpack.c.l.b16 %v1956
      %v2036 = vpack.c.b16 %v2035, %v2034
      %2037 = vrot.lane.b32.xlu0 %v2017, 64
      %v2038 = vpop.permute.xlu0 %2037
      %2039 = vrot.lane.b32.xlu0 %v2018, 64
      %v2040 = vpop.permute.xlu0 %2039
      %2041 = vrot.lane.b32.xlu0 %v2019, 64
      %v2042 = vpop.permute.xlu0 %2041
      %2043 = vrot.lane.b32.xlu0 %v2020, 64
      %v2044 = vpop.permute.xlu0 %2043
      %2045 = vrot.lane.b32.xlu0 %v2021, 64
      %v2046 = vpop.permute.xlu0 %2045
      %2047 = vrot.lane.b32.xlu0 %v2022, 64
      %v2048 = vpop.permute.xlu0 %2047
      %2049 = vrot.lane.b32.xlu0 %v2023, 64
      %v2050 = vpop.permute.xlu0 %2049
      %2051 = vrot.lane.b32.xlu0 %v2024, 64
      %v2052 = vpop.permute.xlu0 %2051
      %2053 = vrot.lane.b32.xlu0 %v2025, 64
      %v2054 = vpop.permute.xlu0 %2053
      %2055 = vrot.lane.b32.xlu0 %v2026, 64
      %v2056 = vpop.permute.xlu0 %2055
      %2057 = vrot.lane.b32.xlu0 %v2027, 64
      %v2058 = vpop.permute.xlu0 %2057
      %2059 = vrot.lane.b32.xlu0 %v2028, 64
      %v2060 = vpop.permute.xlu0 %2059
      %2061 = vrot.lane.b32.xlu0 %v2029, 64
      %v2062 = vpop.permute.xlu0 %2061
      %2063 = vrot.lane.b32.xlu0 %v2030, 64
      %v2064 = vpop.permute.xlu0 %2063
      %2065 = vrot.lane.b32.xlu0 %v2031, 64
      %v2066 = vpop.permute.xlu0 %2065
      %2067 = vrot.lane.b32.xlu0 %v2036, 64
      %v2068 = vpop.permute.xlu0 %2067
      %v2070 = vsel %vm969, 0, %v2038
      %v2074 = vsel %vm969, %v2017, %v2040
      %v2078 = vsel %vm969, %v2018, %v2042
      %v2082 = vsel %vm969, %v2019, %v2044
      %v2086 = vsel %vm969, %v2020, %v2046
      %v2090 = vsel %vm969, %v2021, %v2048
      %v2094 = vsel %vm969, %v2022, %v2050
      %v2098 = vsel %vm969, %v2023, %v2052
      %v2102 = vsel %vm969, %v2024, %v2054
      %v2106 = vsel %vm969, %v2025, %v2056
      %v2110 = vsel %vm969, %v2026, %v2058
      %v2114 = vsel %vm969, %v2027, %v2060
      %v2118 = vsel %vm969, %v2028, %v2062
      %v2122 = vsel %vm969, %v2029, %v2064
      %v2126 = vsel %vm969, %v2030, %v2066
      %v2130 = vsel %vm969, %v2031, %v2068
      %v2132 = vld [vmem:[%s7] sm:$0xf]
      %v2133 = vld [vmem:[%s7 + $0x4] sm:$0xf]
      %v2134 = vld [vmem:[%s7 + $0x8] sm:$0xf]
      %v2135 = vld [vmem:[%s7 + $0xc] sm:$0xf]
      %v2136 = vld [vmem:[%s7 + $0x10] sm:$0xf]
      %v2137 = vld [vmem:[%s7 + $0x14] sm:$0xf]
      %v2138 = vld [vmem:[%s7 + $0x18] sm:$0xf]
      %v2139 = vld [vmem:[%s7 + $0x1c] sm:$0xf]
      %v2140 = vld [vmem:[%s7 + $0x20] sm:$0xf]
      %v2141 = vld [vmem:[%s7 + $0x24] sm:$0xf]
      %v2142 = vld [vmem:[%s7 + $0x28] sm:$0xf]
      %v2143 = vld [vmem:[%s7 + $0x2c] sm:$0xf]
      %v2144 = vld [vmem:[%s7 + $0x30] sm:$0xf]
      %v2145 = vld [vmem:[%s7 + $0x34] sm:$0xf]
      %v2146 = vld [vmem:[%s7 + $0x38] sm:$0xf]
      %v2147 = vld [vmem:[%s7 + $0x3c] sm:$0xf]
      %v2148 = vld [vmem:[%s7 + $0x40] sm:$0xf]
      %v2149 = vld [vmem:[%s7 + $0x44] sm:$0xf]
      %v2150 = vld [vmem:[%s7 + $0x48] sm:$0xf]
      %v2151 = vld [vmem:[%s7 + $0x4c] sm:$0xf]
      %v2152 = vld [vmem:[%s7 + $0x50] sm:$0xf]
      %v2153 = vld [vmem:[%s7 + $0x54] sm:$0xf]
      %v2154 = vld [vmem:[%s7 + $0x58] sm:$0xf]
      %v2155 = vld [vmem:[%s7 + $0x5c] sm:$0xf]
      %v2156 = vld [vmem:[%s8] sm:$0x1]
      %v2158 = vperm.slane %v2156, 0
      %v2184 = vunpack.c.l.b16 %v2132
      %v2185 = vunpack.c.l.b16 %v2133
      %v2186 = vunpack.c.l.b16 %v2134
      %v2187 = vunpack.c.l.b16 %v2135
      %v2188 = vunpack.c.l.b16 %v2136
      %v2189 = vunpack.c.l.b16 %v2137
      %v2190 = vunpack.c.l.b16 %v2138
      %v2191 = vunpack.c.l.b16 %v2139
      %v2192 = vunpack.c.l.b16 %v2140
      %v2193 = vunpack.c.l.b16 %v2141
      %v2194 = vunpack.c.l.b16 %v2142
      %v2195 = vunpack.c.l.b16 %v2143
      %v2196 = vunpack.c.l.b16 %v2144
      %v2197 = vunpack.c.l.b16 %v2145
      %v2198 = vunpack.c.l.b16 %v2146
      %v2199 = vunpack.c.l.b16 %v2147
      %v2200 = vunpack.c.l.b16 %v2148
      %v2201 = vunpack.c.l.b16 %v2149
      %v2202 = vunpack.c.l.b16 %v2150
      %v2203 = vunpack.c.l.b16 %v2151
      %v2204 = vunpack.c.l.b16 %v2152
      %v2205 = vunpack.c.l.b16 %v2153
      %v2206 = vunpack.c.l.b16 %v2154
      %v2207 = vunpack.c.l.b16 %v2155
      %v2208 = vpack.c.b16 %v2185, %v2184
      %v2209 = vpack.c.b16 %v2187, %v2186
      %v2210 = vpack.c.b16 %v2189, %v2188
      %v2211 = vpack.c.b16 %v2191, %v2190
      %v2212 = vpack.c.b16 %v2193, %v2192
      %v2213 = vpack.c.b16 %v2195, %v2194
      %v2214 = vpack.c.b16 %v2197, %v2196
      %v2215 = vpack.c.b16 %v2199, %v2198
      %v2216 = vpack.c.b16 %v2201, %v2200
      %v2217 = vpack.c.b16 %v2203, %v2202
      %v2218 = vpack.c.b16 %v2205, %v2204
      %v2219 = vpack.c.b16 %v2207, %v2206
      %v2232 = vsel %vm969, %v2018, 0
      %v2234 = vsel %vm969, %v2019, 0
      %v2236 = vsel %vm969, %v2020, 0
      %v2238 = vsel %vm969, %v2021, 0
      %v2240 = vsel %vm969, %v2022, 0
      %v2242 = vsel %vm969, %v2023, 0
      %v2244 = vsel %vm969, %v2024, 0
      %v2246 = vsel %vm969, %v2025, 0
      %v2248 = vsel %vm969, %v2026, 0
      %v2250 = vsel %vm969, %v2027, 0
      %v2252 = vsel %vm969, %v2028, 0
      %v2254 = vsel %vm969, %v2029, 0
      %v2256 = vsel %vm969, %v2030, 0
      %v2258 = vsel %vm969, %v2031, 0
      %v2261 = vsel %vm969, %v2036, 0
      %2263 = vmatpush.bf16.msra.mxu0 %v2215
      %2264 = vmatpush.bf16.msra.mxu0 %v2214
      %2265 = vmatpush.bf16.msra.mxu0 %v2213
      %2266 = vmatpush.bf16.msra.mxu0 %v2212
      %2267 = vmatpush.bf16.msra.mxu0 %v2211
      %2268 = vmatpush.bf16.msra.mxu0 %v2210
      %2269 = vmatpush.bf16.msra.mxu0 %v2209
      %2270 = vmatpush.bf16.msra.mxu0 %v2208
      %2271 = vmatmul.bf16.gmra.mxu0 %v2070
      %v2272 = vpop.f32.mrf.mxu0
      %v2273 = vadd.f32 %v2158, %v2272
      %v2274 = vpop.f32.mrf.mxu0
      %v2275 = vadd.f32 %v2158, %v2274
      %2276 = vmatmul.bf16.gmra.mxu0 %v2074
      %v2277 = vpop.f32.mrf.mxu0
      %v2278 = vadd.f32 %v2158, %v2277
      %v2279 = vpop.f32.mrf.mxu0
      %v2280 = vadd.f32 %v2158, %v2279
      %2281 = vmatmul.bf16.gmra.mxu0 %v2078
      %v2282 = vpop.f32.mrf.mxu0
      %v2283 = vadd.f32 %v2158, %v2282
      %v2284 = vpop.f32.mrf.mxu0
      %v2285 = vadd.f32 %v2158, %v2284
      %2286 = vmatmul.bf16.gmra.mxu0 %v2082
      %v2287 = vpop.f32.mrf.mxu0
      %v2288 = vadd.f32 %v2158, %v2287
      %v2289 = vpop.f32.mrf.mxu0
      %v2290 = vadd.f32 %v2158, %v2289
      %2291 = vmatmul.bf16.gmra.mxu0 %v2086
      %v2292 = vpop.f32.mrf.mxu0
      %v2293 = vadd.f32 %v2158, %v2292
      %v2294 = vpop.f32.mrf.mxu0
      %v2295 = vadd.f32 %v2158, %v2294
      %2296 = vmatmul.bf16.gmra.mxu0 %v2090
      %v2297 = vpop.f32.mrf.mxu0
      %v2298 = vadd.f32 %v2158, %v2297
      %v2299 = vpop.f32.mrf.mxu0
      %v2300 = vadd.f32 %v2158, %v2299
      %2301 = vmatmul.bf16.gmra.mxu0 %v2094
      %v2302 = vpop.f32.mrf.mxu0
      %v2303 = vadd.f32 %v2158, %v2302
      %v2304 = vpop.f32.mrf.mxu0
      %v2305 = vadd.f32 %v2158, %v2304
      %2306 = vmatmul.bf16.gmra.mxu0 %v2098
      %v2307 = vpop.f32.mrf.mxu0
      %v2308 = vadd.f32 %v2158, %v2307
      %v2309 = vpop.f32.mrf.mxu0
      %v2310 = vadd.f32 %v2158, %v2309
      %2311 = vmatmul.bf16.gmra.mxu0 %v2102
      %v2312 = vpop.f32.mrf.mxu0
      %v2313 = vadd.f32 %v2158, %v2312
      %v2314 = vpop.f32.mrf.mxu0
      %v2315 = vadd.f32 %v2158, %v2314
      %2316 = vmatmul.bf16.gmra.mxu0 %v2106
      %v2317 = vpop.f32.mrf.mxu0
      %v2318 = vadd.f32 %v2158, %v2317
      %v2319 = vpop.f32.mrf.mxu0
      %v2320 = vadd.f32 %v2158, %v2319
      %2321 = vmatmul.bf16.gmra.mxu0 %v2110
      %v2322 = vpop.f32.mrf.mxu0
      %v2323 = vadd.f32 %v2158, %v2322
      %v2324 = vpop.f32.mrf.mxu0
      %v2325 = vadd.f32 %v2158, %v2324
      %2326 = vmatmul.bf16.gmra.mxu0 %v2114
      %v2327 = vpop.f32.mrf.mxu0
      %v2328 = vadd.f32 %v2158, %v2327
      %v2329 = vpop.f32.mrf.mxu0
      %v2330 = vadd.f32 %v2158, %v2329
      %2331 = vmatmul.bf16.gmra.mxu0 %v2118
      %v2332 = vpop.f32.mrf.mxu0
      %v2333 = vadd.f32 %v2158, %v2332
      %v2334 = vpop.f32.mrf.mxu0
      %v2335 = vadd.f32 %v2158, %v2334
      %2336 = vmatmul.bf16.gmra.mxu0 %v2122
      %v2337 = vpop.f32.mrf.mxu0
      %v2338 = vadd.f32 %v2158, %v2337
      %v2339 = vpop.f32.mrf.mxu0
      %v2340 = vadd.f32 %v2158, %v2339
      %2341 = vmatmul.bf16.gmra.mxu0 %v2126
      %v2342 = vpop.f32.mrf.mxu0
      %v2343 = vadd.f32 %v2158, %v2342
      %v2344 = vpop.f32.mrf.mxu0
      %v2345 = vadd.f32 %v2158, %v2344
      %2346 = vmatmul.bf16.gmra.mxu0 %v2130
      %v2347 = vpop.f32.mrf.mxu0
      %v2348 = vadd.f32 %v2158, %v2347
      %v2349 = vpop.f32.mrf.mxu0
      %v2350 = vadd.f32 %v2158, %v2349
      %2351 = vdwg.mxu0
      %2352 = vmatpush.bf16.msra.mxu0 0
      %2353 = vmatpush.bf16.msra.mxu0 0
      %2354 = vmatpush.bf16.msra.mxu0 0
      %2355 = vmatpush.bf16.msra.mxu0 0
      %2356 = vmatpush.bf16.msra.mxu0 %v2219
      %2357 = vmatpush.bf16.msra.mxu0 %v2218
      %2358 = vmatpush.bf16.msra.mxu0 %v2217
      %2359 = vmatpush.bf16.msra.mxu0 %v2216
      %2360 = vmatmul.bf16.gmra.mxu0 %v2232
      %v2361 = vpop.f32.mrf.mxu0
      %v2362 = vadd.f32 %v2273, %v2361
      %v2363 = vpop.f32.mrf.mxu0
      %v2364 = vadd.f32 %v2275, %v2363
      %2365 = vmatmul.bf16.gmra.mxu0 %v2234
      %v2366 = vpop.f32.mrf.mxu0
      %v2367 = vadd.f32 %v2278, %v2366
      %v2368 = vpop.f32.mrf.mxu0
      %v2369 = vadd.f32 %v2280, %v2368
      %2370 = vmatmul.bf16.gmra.mxu0 %v2236
      %v2371 = vpop.f32.mrf.mxu0
      %v2372 = vadd.f32 %v2283, %v2371
      %v2373 = vpop.f32.mrf.mxu0
      %v2374 = vadd.f32 %v2285, %v2373
      %2375 = vmatmul.bf16.gmra.mxu0 %v2238
      %v2376 = vpop.f32.mrf.mxu0
      %v2377 = vadd.f32 %v2288, %v2376
      %v2378 = vpop.f32.mrf.mxu0
      %v2379 = vadd.f32 %v2290, %v2378
      %2380 = vmatmul.bf16.gmra.mxu0 %v2240
      %v2381 = vpop.f32.mrf.mxu0
      %v2382 = vadd.f32 %v2293, %v2381
      %v2383 = vpop.f32.mrf.mxu0
      %v2384 = vadd.f32 %v2295, %v2383
      %2385 = vmatmul.bf16.gmra.mxu0 %v2242
      %v2386 = vpop.f32.mrf.mxu0
      %v2387 = vadd.f32 %v2298, %v2386
      %v2388 = vpop.f32.mrf.mxu0
      %v2389 = vadd.f32 %v2300, %v2388
      %2390 = vmatmul.bf16.gmra.mxu0 %v2244
      %v2391 = vpop.f32.mrf.mxu0
      %v2392 = vadd.f32 %v2303, %v2391
      %v2393 = vpop.f32.mrf.mxu0
      %v2394 = vadd.f32 %v2305, %v2393
      %2395 = vmatmul.bf16.gmra.mxu0 %v2246
      %v2396 = vpop.f32.mrf.mxu0
      %v2397 = vadd.f32 %v2308, %v2396
      %v2398 = vpop.f32.mrf.mxu0
      %v2399 = vadd.f32 %v2310, %v2398
      %2400 = vmatmul.bf16.gmra.mxu0 %v2248
      %v2401 = vpop.f32.mrf.mxu0
      %v2402 = vadd.f32 %v2313, %v2401
      %v2403 = vpop.f32.mrf.mxu0
      %v2404 = vadd.f32 %v2315, %v2403
      %2405 = vmatmul.bf16.gmra.mxu0 %v2250
      %v2406 = vpop.f32.mrf.mxu0
      %v2407 = vadd.f32 %v2318, %v2406
      %v2408 = vpop.f32.mrf.mxu0
      %v2409 = vadd.f32 %v2320, %v2408
      %2410 = vmatmul.bf16.gmra.mxu0 %v2252
      %v2411 = vpop.f32.mrf.mxu0
      %v2412 = vadd.f32 %v2323, %v2411
      %v2413 = vpop.f32.mrf.mxu0
      %v2414 = vadd.f32 %v2325, %v2413
      %2415 = vmatmul.bf16.gmra.mxu0 %v2254
      %v2416 = vpop.f32.mrf.mxu0
      %v2417 = vadd.f32 %v2328, %v2416
      %v2418 = vpop.f32.mrf.mxu0
      %v2419 = vadd.f32 %v2330, %v2418
      %2420 = vmatmul.bf16.gmra.mxu0 %v2256
      %v2421 = vpop.f32.mrf.mxu0
      %v2422 = vadd.f32 %v2333, %v2421
      %v2423 = vpop.f32.mrf.mxu0
      %v2424 = vadd.f32 %v2335, %v2423
      %2425 = vmatmul.bf16.gmra.mxu0 %v2258
      %v2426 = vpop.f32.mrf.mxu0
      %v2427 = vadd.f32 %v2338, %v2426
      %v2428 = vpop.f32.mrf.mxu0
      %v2429 = vadd.f32 %v2340, %v2428
      %2430 = vmatmul.bf16.gmra.mxu0 %v2261
      %v2431 = vpop.f32.mrf.mxu0
      %v2432 = vadd.f32 %v2343, %v2431
      %v2433 = vpop.f32.mrf.mxu0
      %v2434 = vadd.f32 %v2345, %v2433
      %2435 = vmatmul.bf16.gmra.mxu0 %v1165
      %v2436 = vpop.f32.mrf.mxu0
      %v2437 = vadd.f32 %v2348, %v2436
      %v2438 = vpop.f32.mrf.mxu0
      %v2439 = vadd.f32 %v2350, %v2438
      %2440 = vdwg.mxu0
      %v2441 = vmax.f32 %v2362, 0.0
      %v2442 = vmax.f32 %v2364, 0.0
      %v2443 = vmax.f32 %v2367, 0.0
      %v2444 = vmax.f32 %v2369, 0.0
      %v2445 = vmax.f32 %v2372, 0.0
      %v2446 = vmax.f32 %v2374, 0.0
      %v2447 = vmax.f32 %v2377, 0.0
      %v2448 = vmax.f32 %v2379, 0.0
      %v2449 = vmax.f32 %v2382, 0.0
      %v2450 = vmax.f32 %v2384, 0.0
      %v2451 = vmax.f32 %v2387, 0.0
      %v2452 = vmax.f32 %v2389, 0.0
      %v2453 = vmax.f32 %v2392, 0.0
      %v2454 = vmax.f32 %v2394, 0.0
      %v2455 = vmax.f32 %v2397, 0.0
      %v2456 = vmax.f32 %v2399, 0.0
      %v2457 = vmax.f32 %v2402, 0.0
      %v2458 = vmax.f32 %v2404, 0.0
      %v2459 = vmax.f32 %v2407, 0.0
      %v2460 = vmax.f32 %v2409, 0.0
      %v2461 = vmax.f32 %v2412, 0.0
      %v2462 = vmax.f32 %v2414, 0.0
      %v2463 = vmax.f32 %v2417, 0.0
      %v2464 = vmax.f32 %v2419, 0.0
      %v2465 = vmax.f32 %v2422, 0.0
      %v2466 = vmax.f32 %v2424, 0.0
      %v2467 = vmax.f32 %v2427, 0.0
      %v2468 = vmax.f32 %v2429, 0.0
      %v2469 = vmax.f32 %v2432, 0.0
      %v2470 = vmax.f32 %v2434, 0.0
      %v2471 = vmax.f32 %v2437, 0.0
      %v2472 = vmax.f32 %v2439, 0.0
      %v2473 = vpack.c.bf16 %v2441, %v2441
      %v2474 = vpack.c.bf16 %v2442, %v2442
      %v2475 = vpack.c.bf16 %v2443, %v2443
      %v2476 = vpack.c.bf16 %v2444, %v2444
      %v2477 = vpack.c.bf16 %v2445, %v2445
      %v2478 = vpack.c.bf16 %v2446, %v2446
      %v2479 = vpack.c.bf16 %v2447, %v2447
      %v2480 = vpack.c.bf16 %v2448, %v2448
      %v2481 = vpack.c.bf16 %v2449, %v2449
      %v2482 = vpack.c.bf16 %v2450, %v2450
      %v2483 = vpack.c.bf16 %v2451, %v2451
      %v2484 = vpack.c.bf16 %v2452, %v2452
      %v2485 = vpack.c.bf16 %v2453, %v2453
      %v2486 = vpack.c.bf16 %v2454, %v2454
      %v2487 = vpack.c.bf16 %v2455, %v2455
      %v2488 = vpack.c.bf16 %v2456, %v2456
      %v2489 = vpack.c.bf16 %v2457, %v2457
      %v2490 = vpack.c.bf16 %v2458, %v2458
      %v2491 = vpack.c.bf16 %v2459, %v2459
      %v2492 = vpack.c.bf16 %v2460, %v2460
      %v2493 = vpack.c.bf16 %v2461, %v2461
      %v2494 = vpack.c.bf16 %v2462, %v2462
      %v2495 = vpack.c.bf16 %v2463, %v2463
      %v2496 = vpack.c.bf16 %v2464, %v2464
      %v2497 = vpack.c.bf16 %v2465, %v2465
      %v2498 = vpack.c.bf16 %v2466, %v2466
      %v2499 = vpack.c.bf16 %v2467, %v2467
      %v2500 = vpack.c.bf16 %v2468, %v2468
      %v2501 = vpack.c.bf16 %v2469, %v2469
      %v2502 = vpack.c.bf16 %v2470, %v2470
      %v2503 = vpack.c.bf16 %v2471, %v2471
      %v2504 = vpack.c.bf16 %v2472, %v2472
      %v2507 = vunpack.c.l.b16 %v2473
      %v2508 = vunpack.c.l.b16 %v2474
      %v2509 = vpack.c.b16 %v2508, %v2507
      %v2512 = vunpack.c.l.b16 %v2475
      %v2513 = vunpack.c.l.b16 %v2476
      %v2514 = vpack.c.b16 %v2513, %v2512
      %2515 = vrot.lane.b32.xlu0 %v2514, 64
      %v2516 = vpop.permute.xlu0 %2515
      %v2519 = vunpack.c.l.b16 %v2477
      %v2520 = vunpack.c.l.b16 %v2478
      %v2521 = vpack.c.b16 %v2520, %v2519
      %v2524 = vunpack.c.l.b16 %v2479
      %v2525 = vunpack.c.l.b16 %v2480
      %v2526 = vpack.c.b16 %v2525, %v2524
      %2527 = vrot.lane.b32.xlu0 %v2526, 64
      %v2528 = vpop.permute.xlu0 %2527
      %v2531 = vunpack.c.l.b16 %v2481
      %v2532 = vunpack.c.l.b16 %v2482
      %v2533 = vpack.c.b16 %v2532, %v2531
      %v2536 = vunpack.c.l.b16 %v2483
      %v2537 = vunpack.c.l.b16 %v2484
      %v2538 = vpack.c.b16 %v2537, %v2536
      %2539 = vrot.lane.b32.xlu0 %v2538, 64
      %v2540 = vpop.permute.xlu0 %2539
      %v2543 = vunpack.c.l.b16 %v2485
      %v2544 = vunpack.c.l.b16 %v2486
      %v2545 = vpack.c.b16 %v2544, %v2543
      %v2548 = vunpack.c.l.b16 %v2487
      %v2549 = vunpack.c.l.b16 %v2488
      %v2550 = vpack.c.b16 %v2549, %v2548
      %2551 = vrot.lane.b32.xlu0 %v2550, 64
      %v2552 = vpop.permute.xlu0 %2551
      %v2555 = vunpack.c.l.b16 %v2489
      %v2556 = vunpack.c.l.b16 %v2490
      %v2557 = vpack.c.b16 %v2556, %v2555
      %v2560 = vunpack.c.l.b16 %v2491
      %v2561 = vunpack.c.l.b16 %v2492
      %v2562 = vpack.c.b16 %v2561, %v2560
      %2563 = vrot.lane.b32.xlu0 %v2562, 64
      %v2564 = vpop.permute.xlu0 %2563
      %v2567 = vunpack.c.l.b16 %v2493
      %v2568 = vunpack.c.l.b16 %v2494
      %v2569 = vpack.c.b16 %v2568, %v2567
      %v2572 = vunpack.c.l.b16 %v2495
      %v2573 = vunpack.c.l.b16 %v2496
      %v2574 = vpack.c.b16 %v2573, %v2572
      %2575 = vrot.lane.b32.xlu0 %v2574, 64
      %v2576 = vpop.permute.xlu0 %2575
      %v2579 = vunpack.c.l.b16 %v2497
      %v2580 = vunpack.c.l.b16 %v2498
      %v2581 = vpack.c.b16 %v2580, %v2579
      %v2584 = vunpack.c.l.b16 %v2499
      %v2585 = vunpack.c.l.b16 %v2500
      %v2586 = vpack.c.b16 %v2585, %v2584
      %2587 = vrot.lane.b32.xlu0 %v2586, 64
      %v2588 = vpop.permute.xlu0 %2587
      %v2591 = vunpack.c.l.b16 %v2501
      %v2592 = vunpack.c.l.b16 %v2502
      %v2593 = vpack.c.b16 %v2592, %v2591
      %v2596 = vunpack.c.l.b16 %v2503
      %v2597 = vunpack.c.l.b16 %v2504
      %v2598 = vpack.c.b16 %v2597, %v2596
      %2599 = vrot.lane.b32.xlu0 %v2598, 64
      %v2600 = vpop.permute.xlu0 %2599
      %v2603 = vsel %vm969, %v2509, %v2516
      %v2607 = vsel %vm969, %v2521, %v2528
      %v2611 = vsel %vm969, %v2533, %v2540
      %v2615 = vsel %vm969, %v2545, %v2552
      %v2619 = vsel %vm969, %v2557, %v2564
      %v2623 = vsel %vm969, %v2569, %v2576
      %v2627 = vsel %vm969, %v2581, %v2588
      %v2631 = vsel %vm969, %v2593, %v2600
      %v2633 = vld [vmem:[%s9] sm:$0xf]
      %v2634 = vld [vmem:[%s9 + $0x4] sm:$0xf]
      %v2635 = vld [vmem:[%s9 + $0x8] sm:$0xf]
      %v2636 = vld [vmem:[%s9 + $0xc] sm:$0xf]
      %v2637 = vld [vmem:[%s9 + $0x10] sm:$0xf]
      %v2638 = vld [vmem:[%s9 + $0x14] sm:$0xf]
      %v2639 = vld [vmem:[%s9 + $0x18] sm:$0xf]
      %v2640 = vld [vmem:[%s9 + $0x1c] sm:$0xf]
      %v2641 = vld [vmem:[%s9 + $0x20] sm:$0xf]
      %v2642 = vld [vmem:[%s9 + $0x24] sm:$0xf]
      %v2643 = vld [vmem:[%s9 + $0x28] sm:$0xf]
      %v2644 = vld [vmem:[%s9 + $0x2c] sm:$0xf]
      %v2645 = vld [vmem:[%s9 + $0x30] sm:$0xf]
      %v2646 = vld [vmem:[%s9 + $0x34] sm:$0xf]
      %v2647 = vld [vmem:[%s9 + $0x38] sm:$0xf]
      %v2648 = vld [vmem:[%s9 + $0x3c] sm:$0xf]
      %v2649 = vld [vmem:[%s9 + $0x40] sm:$0xf]
      %v2650 = vld [vmem:[%s9 + $0x44] sm:$0xf]
      %v2651 = vld [vmem:[%s9 + $0x48] sm:$0xf]
      %v2652 = vld [vmem:[%s9 + $0x4c] sm:$0xf]
      %v2653 = vld [vmem:[%s9 + $0x50] sm:$0xf]
      %v2654 = vld [vmem:[%s9 + $0x54] sm:$0xf]
      %v2655 = vld [vmem:[%s9 + $0x58] sm:$0xf]
      %v2656 = vld [vmem:[%s9 + $0x5c] sm:$0xf]
      %v2657 = vld [vmem:[%s9 + $0x60] sm:$0xf]
      %v2658 = vld [vmem:[%s9 + $0x64] sm:$0xf]
      %v2659 = vld [vmem:[%s9 + $0x68] sm:$0xf]
      %v2660 = vld [vmem:[%s9 + $0x6c] sm:$0xf]
      %v2661 = vld [vmem:[%s9 + $0x70] sm:$0xf]
      %v2662 = vld [vmem:[%s9 + $0x74] sm:$0xf]
      %v2663 = vld [vmem:[%s9 + $0x78] sm:$0xf]
      %v2664 = vld [vmem:[%s9 + $0x7c] sm:$0xf]
      %v2665 = vld [vmem:[%s9 + $0x80] sm:$0xf]
      %v2666 = vld [vmem:[%s9 + $0x84] sm:$0xf]
      %v2667 = vld [vmem:[%s9 + $0x88] sm:$0xf]
      %v2668 = vld [vmem:[%s9 + $0x8c] sm:$0xf]
      %v2669 = vld [vmem:[%s9 + $0x90] sm:$0xf]
      %v2670 = vld [vmem:[%s9 + $0x94] sm:$0xf]
      %v2671 = vld [vmem:[%s9 + $0x98] sm:$0xf]
      %v2672 = vld [vmem:[%s9 + $0x9c] sm:$0xf]
      %v2673 = vld [vmem:[%s9 + $0xa0] sm:$0xf]
      %v2674 = vld [vmem:[%s9 + $0xa4] sm:$0xf]
      %v2675 = vld [vmem:[%s9 + $0xa8] sm:$0xf]
      %v2676 = vld [vmem:[%s9 + $0xac] sm:$0xf]
      %v2677 = vld [vmem:[%s9 + $0xb0] sm:$0xf]
      %v2678 = vld [vmem:[%s9 + $0xb4] sm:$0xf]
      %v2679 = vld [vmem:[%s9 + $0xb8] sm:$0xf]
      %v2680 = vld [vmem:[%s9 + $0xbc] sm:$0xf]
      %v2681 = vld [vmem:[%s9 + $0xc0] sm:$0xf]
      %v2682 = vld [vmem:[%s9 + $0xc4] sm:$0xf]
      %v2683 = vld [vmem:[%s9 + $0xc8] sm:$0xf]
      %v2684 = vld [vmem:[%s9 + $0xcc] sm:$0xf]
      %v2685 = vld [vmem:[%s9 + $0xd0] sm:$0xf]
      %v2686 = vld [vmem:[%s9 + $0xd4] sm:$0xf]
      %v2687 = vld [vmem:[%s9 + $0xd8] sm:$0xf]
      %v2688 = vld [vmem:[%s9 + $0xdc] sm:$0xf]
      %v2689 = vld [vmem:[%s9 + $0xe0] sm:$0xf]
      %v2690 = vld [vmem:[%s9 + $0xe4] sm:$0xf]
      %v2691 = vld [vmem:[%s9 + $0xe8] sm:$0xf]
      %v2692 = vld [vmem:[%s9 + $0xec] sm:$0xf]
      %v2693 = vld [vmem:[%s9 + $0xf0] sm:$0xf]
      %v2694 = vld [vmem:[%s9 + $0xf4] sm:$0xf]
      %v2695 = vld [vmem:[%s9 + $0xf8] sm:$0xf]
      %v2696 = vld [vmem:[%s9 + $0xfc] sm:$0xf]
      %v2697 = vld [vmem:[%s9 + $0x100] sm:$0xf]
      %v2698 = vld [vmem:[%s9 + $0x104] sm:$0xf]
      %v2699 = vld [vmem:[%s9 + $0x108] sm:$0xf]
      %v2700 = vld [vmem:[%s9 + $0x10c] sm:$0xf]
      %v2701 = vld [vmem:[%s9 + $0x110] sm:$0xf]
      %v2702 = vld [vmem:[%s9 + $0x114] sm:$0xf]
      %v2703 = vld [vmem:[%s9 + $0x118] sm:$0xf]
      %v2704 = vld [vmem:[%s9 + $0x11c] sm:$0xf]
      %v2705 = vld [vmem:[%s9 + $0x120] sm:$0xf]
      %v2706 = vld [vmem:[%s9 + $0x124] sm:$0xf]
      %v2707 = vld [vmem:[%s9 + $0x128] sm:$0xf]
      %v2708 = vld [vmem:[%s9 + $0x12c] sm:$0xf]
      %v2709 = vld [vmem:[%s9 + $0x130] sm:$0xf]
      %v2710 = vld [vmem:[%s9 + $0x134] sm:$0xf]
      %v2711 = vld [vmem:[%s9 + $0x138] sm:$0xf]
      %v2712 = vld [vmem:[%s9 + $0x13c] sm:$0xf]
      %v2713 = vld [vmem:[%s9 + $0x140] sm:$0xf]
      %v2714 = vld [vmem:[%s9 + $0x144] sm:$0xf]
      %v2715 = vld [vmem:[%s9 + $0x148] sm:$0xf]
      %v2716 = vld [vmem:[%s9 + $0x14c] sm:$0xf]
      %v2717 = vld [vmem:[%s9 + $0x150] sm:$0xf]
      %v2718 = vld [vmem:[%s9 + $0x154] sm:$0xf]
      %v2719 = vld [vmem:[%s9 + $0x158] sm:$0xf]
      %v2720 = vld [vmem:[%s9 + $0x15c] sm:$0xf]
      %v2721 = vld [vmem:[%s9 + $0x160] sm:$0xf]
      %v2722 = vld [vmem:[%s9 + $0x164] sm:$0xf]
      %v2723 = vld [vmem:[%s9 + $0x168] sm:$0xf]
      %v2724 = vld [vmem:[%s9 + $0x16c] sm:$0xf]
      %v2725 = vld [vmem:[%s9 + $0x170] sm:$0xf]
      %v2726 = vld [vmem:[%s9 + $0x174] sm:$0xf]
      %v2727 = vld [vmem:[%s9 + $0x178] sm:$0xf]
      %v2728 = vld [vmem:[%s9 + $0x17c] sm:$0xf]
      %v2729 = vld [vmem:[%s9 + $0x180] sm:$0xf]
      %v2730 = vld [vmem:[%s9 + $0x184] sm:$0xf]
      %v2731 = vld [vmem:[%s9 + $0x188] sm:$0xf]
      %v2732 = vld [vmem:[%s9 + $0x18c] sm:$0xf]
      %v2733 = vld [vmem:[%s9 + $0x190] sm:$0xf]
      %v2734 = vld [vmem:[%s9 + $0x194] sm:$0xf]
      %v2735 = vld [vmem:[%s9 + $0x198] sm:$0xf]
      %v2736 = vld [vmem:[%s9 + $0x19c] sm:$0xf]
      %v2737 = vld [vmem:[%s9 + $0x1a0] sm:$0xf]
      %v2738 = vld [vmem:[%s9 + $0x1a4] sm:$0xf]
      %v2739 = vld [vmem:[%s9 + $0x1a8] sm:$0xf]
      %v2740 = vld [vmem:[%s9 + $0x1ac] sm:$0xf]
      %v2741 = vld [vmem:[%s9 + $0x1b0] sm:$0xf]
      %v2742 = vld [vmem:[%s9 + $0x1b4] sm:$0xf]
      %v2743 = vld [vmem:[%s9 + $0x1b8] sm:$0xf]
      %v2744 = vld [vmem:[%s9 + $0x1bc] sm:$0xf]
      %v2745 = vld [vmem:[%s9 + $0x1c0] sm:$0xf]
      %v2746 = vld [vmem:[%s9 + $0x1c4] sm:$0xf]
      %v2747 = vld [vmem:[%s9 + $0x1c8] sm:$0xf]
      %v2748 = vld [vmem:[%s9 + $0x1cc] sm:$0xf]
      %v2749 = vld [vmem:[%s9 + $0x1d0] sm:$0xf]
      %v2750 = vld [vmem:[%s9 + $0x1d4] sm:$0xf]
      %v2751 = vld [vmem:[%s9 + $0x1d8] sm:$0xf]
      %v2752 = vld [vmem:[%s9 + $0x1dc] sm:$0xf]
      %v2753 = vld [vmem:[%s9 + $0x1e0] sm:$0xf]
      %v2754 = vld [vmem:[%s9 + $0x1e4] sm:$0xf]
      %v2755 = vld [vmem:[%s9 + $0x1e8] sm:$0xf]
      %v2756 = vld [vmem:[%s9 + $0x1ec] sm:$0xf]
      %v2757 = vld [vmem:[%s9 + $0x1f0] sm:$0xf]
      %v2758 = vld [vmem:[%s9 + $0x1f4] sm:$0xf]
      %v2759 = vld [vmem:[%s9 + $0x1f8] sm:$0xf]
      %v2760 = vld [vmem:[%s9 + $0x1fc] sm:$0xf]
      %v2761 = vld [vmem:[%s10] sm:$0x1]
      %v2763 = vperm.slane %v2761, 0
      %v2893 = vunpack.c.l.b16 %v2633
      %v2894 = vunpack.c.l.b16 %v2634
      %v2895 = vunpack.c.l.b16 %v2635
      %v2896 = vunpack.c.l.b16 %v2636
      %v2897 = vunpack.c.l.b16 %v2637
      %v2898 = vunpack.c.l.b16 %v2638
      %v2899 = vunpack.c.l.b16 %v2639
      %v2900 = vunpack.c.l.b16 %v2640
      %v2901 = vunpack.c.l.b16 %v2641
      %v2902 = vunpack.c.l.b16 %v2642
      %v2903 = vunpack.c.l.b16 %v2643
      %v2904 = vunpack.c.l.b16 %v2644
      %v2905 = vunpack.c.l.b16 %v2645
      %v2906 = vunpack.c.l.b16 %v2646
      %v2907 = vunpack.c.l.b16 %v2647
      %v2908 = vunpack.c.l.b16 %v2648
      %v2909 = vunpack.c.l.b16 %v2649
      %v2910 = vunpack.c.l.b16 %v2650
      %v2911 = vunpack.c.l.b16 %v2651
      %v2912 = vunpack.c.l.b16 %v2652
      %v2913 = vunpack.c.l.b16 %v2653
      %v2914 = vunpack.c.l.b16 %v2654
      %v2915 = vunpack.c.l.b16 %v2655
      %v2916 = vunpack.c.l.b16 %v2656
      %v2917 = vunpack.c.l.b16 %v2657
      %v2918 = vunpack.c.l.b16 %v2658
      %v2919 = vunpack.c.l.b16 %v2659
      %v2920 = vunpack.c.l.b16 %v2660
      %v2921 = vunpack.c.l.b16 %v2661
      %v2922 = vunpack.c.l.b16 %v2662
      %v2923 = vunpack.c.l.b16 %v2663
      %v2924 = vunpack.c.l.b16 %v2664
      %v2925 = vunpack.c.l.b16 %v2665
      %v2926 = vunpack.c.l.b16 %v2666
      %v2927 = vunpack.c.l.b16 %v2667
      %v2928 = vunpack.c.l.b16 %v2668
      %v2929 = vunpack.c.l.b16 %v2669
      %v2930 = vunpack.c.l.b16 %v2670
      %v2931 = vunpack.c.l.b16 %v2671
      %v2932 = vunpack.c.l.b16 %v2672
      %v2933 = vunpack.c.l.b16 %v2673
      %v2934 = vunpack.c.l.b16 %v2674
      %v2935 = vunpack.c.l.b16 %v2675
      %v2936 = vunpack.c.l.b16 %v2676
      %v2937 = vunpack.c.l.b16 %v2677
      %v2938 = vunpack.c.l.b16 %v2678
      %v2939 = vunpack.c.l.b16 %v2679
      %v2940 = vunpack.c.l.b16 %v2680
      %v2941 = vunpack.c.l.b16 %v2681
      %v2942 = vunpack.c.l.b16 %v2682
      %v2943 = vunpack.c.l.b16 %v2683
      %v2944 = vunpack.c.l.b16 %v2684
      %v2945 = vunpack.c.l.b16 %v2685
      %v2946 = vunpack.c.l.b16 %v2686
      %v2947 = vunpack.c.l.b16 %v2687
      %v2948 = vunpack.c.l.b16 %v2688
      %v2949 = vunpack.c.l.b16 %v2689
      %v2950 = vunpack.c.l.b16 %v2690
      %v2951 = vunpack.c.l.b16 %v2691
      %v2952 = vunpack.c.l.b16 %v2692
      %v2953 = vunpack.c.l.b16 %v2693
      %v2954 = vunpack.c.l.b16 %v2694
      %v2955 = vunpack.c.l.b16 %v2695
      %v2956 = vunpack.c.l.b16 %v2696
      %v2957 = vunpack.c.l.b16 %v2697
      %v2958 = vunpack.c.l.b16 %v2698
      %v2959 = vunpack.c.l.b16 %v2699
      %v2960 = vunpack.c.l.b16 %v2700
      %v2961 = vunpack.c.l.b16 %v2701
      %v2962 = vunpack.c.l.b16 %v2702
      %v2963 = vunpack.c.l.b16 %v2703
      %v2964 = vunpack.c.l.b16 %v2704
      %v2965 = vunpack.c.l.b16 %v2705
      %v2966 = vunpack.c.l.b16 %v2706
      %v2967 = vunpack.c.l.b16 %v2707
      %v2968 = vunpack.c.l.b16 %v2708
      %v2969 = vunpack.c.l.b16 %v2709
      %v2970 = vunpack.c.l.b16 %v2710
      %v2971 = vunpack.c.l.b16 %v2711
      %v2972 = vunpack.c.l.b16 %v2712
      %v2973 = vunpack.c.l.b16 %v2713
      %v2974 = vunpack.c.l.b16 %v2714
      %v2975 = vunpack.c.l.b16 %v2715
      %v2976 = vunpack.c.l.b16 %v2716
      %v2977 = vunpack.c.l.b16 %v2717
      %v2978 = vunpack.c.l.b16 %v2718
      %v2979 = vunpack.c.l.b16 %v2719
      %v2980 = vunpack.c.l.b16 %v2720
      %v2981 = vunpack.c.l.b16 %v2721
      %v2982 = vunpack.c.l.b16 %v2722
      %v2983 = vunpack.c.l.b16 %v2723
      %v2984 = vunpack.c.l.b16 %v2724
      %v2985 = vunpack.c.l.b16 %v2725
      %v2986 = vunpack.c.l.b16 %v2726
      %v2987 = vunpack.c.l.b16 %v2727
      %v2988 = vunpack.c.l.b16 %v2728
      %v2989 = vunpack.c.l.b16 %v2729
      %v2990 = vunpack.c.l.b16 %v2730
      %v2991 = vunpack.c.l.b16 %v2731
      %v2992 = vunpack.c.l.b16 %v2732
      %v2993 = vunpack.c.l.b16 %v2733
      %v2994 = vunpack.c.l.b16 %v2734
      %v2995 = vunpack.c.l.b16 %v2735
      %v2996 = vunpack.c.l.b16 %v2736
      %v2997 = vunpack.c.l.b16 %v2737
      %v2998 = vunpack.c.l.b16 %v2738
      %v2999 = vunpack.c.l.b16 %v2739
      %v3000 = vunpack.c.l.b16 %v2740
      %v3001 = vunpack.c.l.b16 %v2741
      %v3002 = vunpack.c.l.b16 %v2742
      %v3003 = vunpack.c.l.b16 %v2743
      %v3004 = vunpack.c.l.b16 %v2744
      %v3005 = vunpack.c.l.b16 %v2745
      %v3006 = vunpack.c.l.b16 %v2746
      %v3007 = vunpack.c.l.b16 %v2747
      %v3008 = vunpack.c.l.b16 %v2748
      %v3009 = vunpack.c.l.b16 %v2749
      %v3010 = vunpack.c.l.b16 %v2750
      %v3011 = vunpack.c.l.b16 %v2751
      %v3012 = vunpack.c.l.b16 %v2752
      %v3013 = vunpack.c.l.b16 %v2753
      %v3014 = vunpack.c.l.b16 %v2754
      %v3015 = vunpack.c.l.b16 %v2755
      %v3016 = vunpack.c.l.b16 %v2756
      %v3017 = vunpack.c.l.b16 %v2757
      %v3018 = vunpack.c.l.b16 %v2758
      %v3019 = vunpack.c.l.b16 %v2759
      %v3020 = vunpack.c.l.b16 %v2760
      %v3021 = vpack.c.b16 %v2894, %v2893
      %v3022 = vpack.c.b16 %v2896, %v2895
      %v3023 = vpack.c.b16 %v2898, %v2897
      %v3024 = vpack.c.b16 %v2900, %v2899
      %v3025 = vpack.c.b16 %v2902, %v2901
      %v3026 = vpack.c.b16 %v2904, %v2903
      %v3027 = vpack.c.b16 %v2906, %v2905
      %v3028 = vpack.c.b16 %v2908, %v2907
      %v3029 = vpack.c.b16 %v2910, %v2909
      %v3030 = vpack.c.b16 %v2912, %v2911
      %v3031 = vpack.c.b16 %v2914, %v2913
      %v3032 = vpack.c.b16 %v2916, %v2915
      %v3033 = vpack.c.b16 %v2918, %v2917
      %v3034 = vpack.c.b16 %v2920, %v2919
      %v3035 = vpack.c.b16 %v2922, %v2921
      %v3036 = vpack.c.b16 %v2924, %v2923
      %v3037 = vpack.c.b16 %v2926, %v2925
      %v3038 = vpack.c.b16 %v2928, %v2927
      %v3039 = vpack.c.b16 %v2930, %v2929
      %v3040 = vpack.c.b16 %v2932, %v2931
      %v3041 = vpack.c.b16 %v2934, %v2933
      %v3042 = vpack.c.b16 %v2936, %v2935
      %v3043 = vpack.c.b16 %v2938, %v2937
      %v3044 = vpack.c.b16 %v2940, %v2939
      %v3045 = vpack.c.b16 %v2942, %v2941
      %v3046 = vpack.c.b16 %v2944, %v2943
      %v3047 = vpack.c.b16 %v2946, %v2945
      %v3048 = vpack.c.b16 %v2948, %v2947
      %v3049 = vpack.c.b16 %v2950, %v2949
      %v3050 = vpack.c.b16 %v2952, %v2951
      %v3051 = vpack.c.b16 %v2954, %v2953
      %v3052 = vpack.c.b16 %v2956, %v2955
      %v3053 = vpack.c.b16 %v2958, %v2957
      %v3054 = vpack.c.b16 %v2960, %v2959
      %v3055 = vpack.c.b16 %v2962, %v2961
      %v3056 = vpack.c.b16 %v2964, %v2963
      %v3057 = vpack.c.b16 %v2966, %v2965
      %v3058 = vpack.c.b16 %v2968, %v2967
      %v3059 = vpack.c.b16 %v2970, %v2969
      %v3060 = vpack.c.b16 %v2972, %v2971
      %v3061 = vpack.c.b16 %v2974, %v2973
      %v3062 = vpack.c.b16 %v2976, %v2975
      %v3063 = vpack.c.b16 %v2978, %v2977
      %v3064 = vpack.c.b16 %v2980, %v2979
      %v3065 = vpack.c.b16 %v2982, %v2981
      %v3066 = vpack.c.b16 %v2984, %v2983
      %v3067 = vpack.c.b16 %v2986, %v2985
      %v3068 = vpack.c.b16 %v2988, %v2987
      %v3069 = vpack.c.b16 %v2990, %v2989
      %v3070 = vpack.c.b16 %v2992, %v2991
      %v3071 = vpack.c.b16 %v2994, %v2993
      %v3072 = vpack.c.b16 %v2996, %v2995
      %v3073 = vpack.c.b16 %v2998, %v2997
      %v3074 = vpack.c.b16 %v3000, %v2999
      %v3075 = vpack.c.b16 %v3002, %v3001
      %v3076 = vpack.c.b16 %v3004, %v3003
      %v3077 = vpack.c.b16 %v3006, %v3005
      %v3078 = vpack.c.b16 %v3008, %v3007
      %v3079 = vpack.c.b16 %v3010, %v3009
      %v3080 = vpack.c.b16 %v3012, %v3011
      %v3081 = vpack.c.b16 %v3014, %v3013
      %v3082 = vpack.c.b16 %v3016, %v3015
      %v3083 = vpack.c.b16 %v3018, %v3017
      %v3084 = vpack.c.b16 %v3020, %v3019
      %3149 = vmatpush.bf16.msra.mxu0 %v3028
      %3150 = vmatpush.bf16.msra.mxu0 %v3027
      %3151 = vmatpush.bf16.msra.mxu0 %v3026
      %3152 = vmatpush.bf16.msra.mxu0 %v3025
      %3153 = vmatpush.bf16.msra.mxu0 %v3024
      %3154 = vmatpush.bf16.msra.mxu0 %v3023
      %3155 = vmatpush.bf16.msra.mxu0 %v3022
      %3156 = vmatpush.bf16.msra.mxu0 %v3021
      %3157 = vmatmul.bf16.gmra.mxu0 %v2603
      %v3158 = vpop.f32.mrf.mxu0
      %v3159 = vadd.f32 %v2763, %v3158
      %v3160 = vpop.f32.mrf.mxu0
      %v3161 = vadd.f32 %v2763, %v3160
      %3162 = vdwg.mxu0
      %3163 = vmatpush.bf16.msra.mxu0 %v3036
      %3164 = vmatpush.bf16.msra.mxu0 %v3035
      %3165 = vmatpush.bf16.msra.mxu0 %v3034
      %3166 = vmatpush.bf16.msra.mxu0 %v3033
      %3167 = vmatpush.bf16.msra.mxu0 %v3032
      %3168 = vmatpush.bf16.msra.mxu0 %v3031
      %3169 = vmatpush.bf16.msra.mxu0 %v3030
      %3170 = vmatpush.bf16.msra.mxu0 %v3029
      %3171 = vmatmul.bf16.gmra.mxu0 %v2607
      %v3172 = vpop.f32.mrf.mxu0
      %v3173 = vadd.f32 %v3159, %v3172
      %v3174 = vpop.f32.mrf.mxu0
      %v3175 = vadd.f32 %v3161, %v3174
      %3176 = vdwg.mxu0
      %3177 = vmatpush.bf16.msra.mxu0 %v3044
      %3178 = vmatpush.bf16.msra.mxu0 %v3043
      %3179 = vmatpush.bf16.msra.mxu0 %v3042
      %3180 = vmatpush.bf16.msra.mxu0 %v3041
      %3181 = vmatpush.bf16.msra.mxu0 %v3040
      %3182 = vmatpush.bf16.msra.mxu0 %v3039
      %3183 = vmatpush.bf16.msra.mxu0 %v3038
      %3184 = vmatpush.bf16.msra.mxu0 %v3037
      %3185 = vmatmul.bf16.gmra.mxu0 %v2611
      %v3186 = vpop.f32.mrf.mxu0
      %v3187 = vadd.f32 %v3173, %v3186
      %v3188 = vpop.f32.mrf.mxu0
      %v3189 = vadd.f32 %v3175, %v3188
      %3190 = vdwg.mxu0
      %3191 = vmatpush.bf16.msra.mxu0 %v3052
      %3192 = vmatpush.bf16.msra.mxu0 %v3051
      %3193 = vmatpush.bf16.msra.mxu0 %v3050
      %3194 = vmatpush.bf16.msra.mxu0 %v3049
      %3195 = vmatpush.bf16.msra.mxu0 %v3048
      %3196 = vmatpush.bf16.msra.mxu0 %v3047
      %3197 = vmatpush.bf16.msra.mxu0 %v3046
      %3198 = vmatpush.bf16.msra.mxu0 %v3045
      %3199 = vmatmul.bf16.gmra.mxu0 %v2615
      %v3200 = vpop.f32.mrf.mxu0
      %v3201 = vadd.f32 %v3187, %v3200
      %v3202 = vpop.f32.mrf.mxu0
      %v3203 = vadd.f32 %v3189, %v3202
      %3204 = vdwg.mxu0
      %3205 = vmatpush.bf16.msra.mxu0 %v3060
      %3206 = vmatpush.bf16.msra.mxu0 %v3059
      %3207 = vmatpush.bf16.msra.mxu0 %v3058
      %3208 = vmatpush.bf16.msra.mxu0 %v3057
      %3209 = vmatpush.bf16.msra.mxu0 %v3056
      %3210 = vmatpush.bf16.msra.mxu0 %v3055
      %3211 = vmatpush.bf16.msra.mxu0 %v3054
      %3212 = vmatpush.bf16.msra.mxu0 %v3053
      %3213 = vmatmul.bf16.gmra.mxu0 %v2619
      %v3214 = vpop.f32.mrf.mxu0
      %v3215 = vadd.f32 %v3201, %v3214
      %v3216 = vpop.f32.mrf.mxu0
      %v3217 = vadd.f32 %v3203, %v3216
      %3218 = vdwg.mxu0
      %3219 = vmatpush.bf16.msra.mxu0 %v3068
      %3220 = vmatpush.bf16.msra.mxu0 %v3067
      %3221 = vmatpush.bf16.msra.mxu0 %v3066
      %3222 = vmatpush.bf16.msra.mxu0 %v3065
      %3223 = vmatpush.bf16.msra.mxu0 %v3064
      %3224 = vmatpush.bf16.msra.mxu0 %v3063
      %3225 = vmatpush.bf16.msra.mxu0 %v3062
      %3226 = vmatpush.bf16.msra.mxu0 %v3061
      %3227 = vmatmul.bf16.gmra.mxu0 %v2623
      %v3228 = vpop.f32.mrf.mxu0
      %v3229 = vadd.f32 %v3215, %v3228
      %v3230 = vpop.f32.mrf.mxu0
      %v3231 = vadd.f32 %v3217, %v3230
      %3232 = vdwg.mxu0
      %3233 = vmatpush.bf16.msra.mxu0 %v3076
      %3234 = vmatpush.bf16.msra.mxu0 %v3075
      %3235 = vmatpush.bf16.msra.mxu0 %v3074
      %3236 = vmatpush.bf16.msra.mxu0 %v3073
      %3237 = vmatpush.bf16.msra.mxu0 %v3072
      %3238 = vmatpush.bf16.msra.mxu0 %v3071
      %3239 = vmatpush.bf16.msra.mxu0 %v3070
      %3240 = vmatpush.bf16.msra.mxu0 %v3069
      %3241 = vmatmul.bf16.gmra.mxu0 %v2627
      %v3242 = vpop.f32.mrf.mxu0
      %v3243 = vadd.f32 %v3229, %v3242
      %v3244 = vpop.f32.mrf.mxu0
      %v3245 = vadd.f32 %v3231, %v3244
      %3246 = vdwg.mxu0
      %3247 = vmatpush.bf16.msra.mxu0 %v3084
      %3248 = vmatpush.bf16.msra.mxu0 %v3083
      %3249 = vmatpush.bf16.msra.mxu0 %v3082
      %3250 = vmatpush.bf16.msra.mxu0 %v3081
      %3251 = vmatpush.bf16.msra.mxu0 %v3080
      %3252 = vmatpush.bf16.msra.mxu0 %v3079
      %3253 = vmatpush.bf16.msra.mxu0 %v3078
      %3254 = vmatpush.bf16.msra.mxu0 %v3077
      %3255 = vmatmul.bf16.gmra.mxu0 %v2631
      %v3256 = vpop.f32.mrf.mxu0
      %v3257 = vadd.f32 %v3243, %v3256
      %v3258 = vpop.f32.mrf.mxu0
      %v3259 = vadd.f32 %v3245, %v3258
      %3260 = vdwg.mxu0
      %vm3261 = vcmask 130048
      %3262 = vst.msk [vmem:[%s386] sm:$0xff] %vm3261, %v3257
      %3263 = vst.msk [vmem:[%s386 + $0x8] sm:$0xff] %vm3261, %v3259
      %p3264 = scmp.lt.s32.totalorder %s22, 3
      %s3265 = scalar_select %p3264, %s22, 3
      %s3266 = smul.addr %s3265, 2
      %s3267 = smul.addr %s3266, 8
      %s3268 = scalar_lea.vmem %s11, %s3267
      // Predicated region
      $region65: #{fwd.1} parent=63 // pred_check
        %p3269 = pneg %p276
      $region66: #{fwd.1} parent=63 // pred_check_branch
        %3271 = sbr.rel (%p3269) target = $region68
      $region67: #{fwd.1} parent=63 // pred_region
        _
      $region68: #{fwd.1} parent=63 // pred_fallthru
        _
    $region64: #{fwd.1} parent=5 // pred_fallthru
      _
    %p3272 = scmp.le.s32.totalorder 2, %s17
    // Predicated region
    $region69: #{fwd.1} parent=5 // pred_check
      %p3273 = pneg %p3272
    $region70: #{fwd.1} parent=5 // pred_check_branch
      %3275 = sbr.rel (%p3273) target = $region72
    $region71: #{fwd.1} parent=5 // pred_region
      %s3276 = ssub.s32 %s17, 2
      // Predicated region
      $region73: #{fwd.1} parent=71 // pred_check
        %p3277 = pneg %p282
      $region74: #{fwd.1} parent=71 // pred_check_branch
        %3279 = sbr.rel (%p3277) target = $region76
      $region75: #{fwd.1} parent=71 // pred_region
        %p3280 = scmp.lt.s32.totalorder %s23, 3
        %s3281 = scalar_select %p3280, %s23, 3
        %s3282 = smul.addr %s3281, 2
        %s3283 = smul.addr %s3282, 8
        %s3284 = scalar_lea.vmem %s11, %s3283
      $region76: #{fwd.1} parent=71 // pred_fallthru
        _
    $region72: #{fwd.1} parent=5 // pred_fallthru
      _
  $region6: #{fwd.1} parent=0 // loop_footer
    %s21 = sadd.s32 1, %s17
  $region7: #{fwd.1} parent=0 // loop_footer_branch
    %16 = sbr.rel target = $region3
  $region8: #{fwd.1} parent=0 // loop_exit
    _

</llo_original>
